<compile_context>
chip_gen: v7x
topology: tpu7x:2x2x1
jax: 0.10.0
libtpu: 0.0.40
codegen_flags: <defaults>
</compile_context>

<pallas_src>
import functools

import jax
import jax.numpy as jnp
from jax.experimental import pallas as pl
from jax.experimental.pallas import tpu as pltpu


def _round_up(x, m):
    return (x + m - 1) // m * m


def _conv_kernel(x_ref, w_ref, b_ref, o_ref, col_ref, *, k2, c_pad, pitch, m_tile):
    """One (batch, row-tile) grid step of a stride-1 VALID conv.

    x_ref:   (C_pad, L_in)      bf16  flat input rows with row pitch `pitch` (x128)
    w_ref:   (C_out_pad, K)     bf16  weights, K = k2*k2*C_pad, row (dy*k2+dx)*C_pad+ci
    b_ref:   (C_out_pad, 1)     f32   bias column
    o_ref:   (C_out_pad, M)     f32   pitched output tile, M = TR * pitch
    col_ref: (K, M)             bf16  VMEM scratch: stacked im2col operand
    """
    # Build the stacked operand once per tile. `pitch` is a multiple of 128 so
    # the dy offsets are lane-aligned; only the k2 distinct dx offsets rotate.
    for dy in range(k2):
        for dx in range(k2):
            t = dy * k2 + dx
            off = dy * pitch + dx
            col_ref[t * c_pad:(t + 1) * c_pad, :] = x_ref[:, off:off + m_tile]
    # One deep matmul on the MXU (contraction depth K instead of C_in).
    o_ref[...] = jnp.dot(w_ref[...], col_ref[...],
                         preferred_element_type=jnp.float32) + b_ref[...]


def _vmem_budget_bytes():
    """Per-grid-step VMEM budget, derived from the generation's VMEM capacity."""
    try:
        info = pltpu.get_tpu_info()
        cap = int(getattr(info, "vmem_capacity_bytes", 64 * 2 ** 20))
    except Exception:  # interpret mode / query unavailable
        cap = 64 * 2 ** 20
    return max(4 * 2 ** 20, min(16 * 2 ** 20, cap // 8))


def _conv_valid_stride1(x, weight, bias):
    """Stride-1 VALID conv in NCHW: x (N,C,Hin,Win), weight (C_out,C,k2,k2)."""
    n, c, hin, win = x.shape
    c_out, _, k2, _ = weight.shape
    h_out = hin - k2 + 1
    w_out = win - k2 + 1

    c_pad = _round_up(c, 8)                  # sublane-aligned per-tap channel block
    c_out_pad = _round_up(c_out, 8)
    pitch = _round_up(w_out + k2 - 1, 128)   # lane-dense row pitch (>= win)
    k_dim = k2 * k2 * c_pad                  # MXU contraction depth

    # --- row-tile height from the VMEM budget -------------------------------
    bytes_per_row = pitch * (2 * c_pad * 2 + k_dim * 2 + 2 * c_out_pad * 4)
    tr = int(max(1, min(h_out, _vmem_budget_bytes() // max(1, bytes_per_row))))
    tr = int(min(h_out, max(tr, -(-512 // pitch))))      # >= ~512 output lanes/step
    num_tiles = -(-h_out // tr)
    # v7x has 2 TensorCores: guarantee >= 2 parallel grid steps when possible.
    if n * num_tiles < 2 and h_out > 1:
        tr = -(-h_out // 2)
        num_tiles = -(-h_out // tr)
    h_out_pad = num_tiles * tr

    m_tile = tr * pitch                       # output lanes per grid step
    l_in = (tr + k2) * pitch                  # tile rows + halo + tail spare row

    # --- layout glue (XLA-fused pads / casts / gathers) ---------------------
    hrows = h_out_pad + k2
    x2 = jnp.pad(x, ((0, 0), (0, c_pad - c), (0, hrows - hin), (0, pitch - win)))
    x2 = x2.astype(jnp.bfloat16)
    # Overlapping row tiles (halo duplicated by the wrapper).
    row_idx = jnp.arange(num_tiles)[:, None] * tr + jnp.arange(tr + k2)[None, :]
    x_tiles = x2[:, :, row_idx, :]                        # (N, C_pad, T, tr+k2, P)
    x_tiles = x_tiles.transpose(0, 2, 1, 3, 4).reshape(n, num_tiles, c_pad, l_in)

    # Weights -> (C_out_pad, K) with row index (dy*k2 + dx)*C_pad + ci.
    w_mat = jnp.pad(weight, ((0, c_out_pad - c_out), (0, c_pad - c), (0, 0), (0, 0)))
    w_mat = w_mat.transpose(0, 2, 3, 1).reshape(c_out_pad, k_dim).astype(jnp.bfloat16)
    b_col = jnp.pad(bias, (0, c_out_pad - c_out)).reshape(c_out_pad, 1)
    b_col = b_col.astype(jnp.float32)

    step_bytes = (2 * c_pad * l_in * 2 + 2 * c_out_pad * m_tile * 4
                  + k_dim * m_tile * 2 + 2 * c_out_pad * k_dim * 2 + 4096)
    cost = pl.CostEstimate(
        flops=2 * n * num_tiles * c_out_pad * k_dim * m_tile,
        transcendentals=0,
        bytes_accessed=(x_tiles.size * 2 + w_mat.size * 2 + b_col.size * 4
                        + n * num_tiles * c_out_pad * m_tile * 4),
    )

    kernel = functools.partial(_conv_kernel, k2=k2, c_pad=c_pad,
                               pitch=pitch, m_tile=m_tile)
    out = pl.pallas_call(
        kernel,
        out_shape=jax.ShapeDtypeStruct((n, num_tiles, c_out_pad, m_tile),
                                       jnp.float32),
        grid_spec=pltpu.PrefetchScalarGridSpec(
            num_scalar_prefetch=0,
            grid=(n, num_tiles),
            in_specs=[
                pl.BlockSpec((None, None, c_pad, l_in), lambda i, r: (i, r, 0, 0)),
                pl.BlockSpec((c_out_pad, k_dim), lambda i, r: (0, 0)),
                pl.BlockSpec((c_out_pad, 1), lambda i, r: (0, 0)),
            ],
            out_specs=pl.BlockSpec((None, None, c_out_pad, m_tile),
                                   lambda i, r: (i, r, 0, 0)),
            scratch_shapes=[pltpu.VMEM((k_dim, m_tile), jnp.bfloat16)],
        ),
        compiler_params=pltpu.CompilerParams(
            dimension_semantics=("parallel", "parallel"),
            vmem_limit_bytes=int(min(64 * 2 ** 20,
                                     max(8 * 2 ** 20, 2 * step_bytes))),
        ),
        cost_estimate=cost,
    )(x_tiles, w_mat, b_col)

    # (N, T, C_out_pad, TR*P) -> NCHW; drop channel / row / lane padding.
    out = out.reshape(n, num_tiles, c_out_pad, tr, pitch)
    out = out.transpose(0, 2, 1, 3, 4).reshape(n, c_out_pad, h_out_pad, pitch)
    return out[:, :c_out, :h_out, :w_out]


@functools.partial(jax.jit, static_argnames=("kernel_size", "stride"))
def conv_layer_forward(x, weight, bias, *, kernel_size, stride):
    """ConvLayer.forward: ReflectionPad2d(k//2) then Conv2d(k, stride).

    x:      (N, C_in, H, W)           float32, NCHW
    weight: (C_out, C_in, k, k)       float32 (PyTorch Conv2d layout)
    bias:   (C_out,)                  float32
    returns (N, C_out, H_out, W_out)  float32, NCHW
    """
    n, c_in, h, w = x.shape
    c_out = weight.shape[0]
    k, s = kernel_size, stride
    pad = k // 2

    x_pad = jnp.pad(x, ((0, 0), (0, 0), (pad, pad), (pad, pad)), mode="reflect")
    hp, wp = h + 2 * pad, w + 2 * pad
    h_out = (hp - k) // s + 1
    w_out = (wp - k) // s + 1

    if s == 1:
        x_eff, w_eff = x_pad, weight
    else:
        # Polyphase / space-to-depth: fold the stride into the channel axis so
        # the kernel only computes the strided output phases.
        k2 = -(-k // s)
        kp = k2 * s
        w_p = jnp.pad(weight, ((0, 0), (0, 0), (0, kp - k), (0, kp - k)))
        w_eff = w_p.reshape(c_out, c_in, k2, s, k2, s).transpose(0, 1, 3, 5, 2, 4)
        w_eff = w_eff.reshape(c_out, c_in * s * s, k2, k2)

        hin_e, win_e = h_out + k2 - 1, w_out + k2 - 1
        x_p = x_pad[:, :, :min(hp, hin_e * s), :min(wp, win_e * s)]
        x_p = jnp.pad(x_p, ((0, 0), (0, 0),
                            (0, hin_e * s - x_p.shape[2]),
                            (0, win_e * s - x_p.shape[3])))
        x_eff = x_p.reshape(n, c_in, hin_e, s, win_e, s).transpose(0, 1, 3, 5, 2, 4)
        x_eff = x_eff.reshape(n, c_in * s * s, hin_e, win_e)

    return _conv_valid_stride1(x_eff, w_eff, bias)


if __name__ == "__main__":
    key = jax.random.PRNGKey(0)

    def reference(x, weight, bias, k, stride, dtype):
        pad = k // 2
        xp = jnp.pad(x, ((0, 0), (0, 0), (pad, pad), (pad, pad)), mode="reflect")
        return jax.lax.conv_general_dilated(
            xp.astype(dtype), weight.astype(dtype),
            window_strides=(stride, stride), padding="VALID",
            dimension_numbers=("NCHW", "OIHW", "NCHW"),
            preferred_element_type=jnp.float32) + bias[None, :, None, None]

    batch, spatial = 2, 16
    # ConvLayer(4, 8, 3, 1) and the downsampling ConvLayer(4, 8, 3, 2).
    for (c_in, c_out, k, stride) in [(4, 8, 3, 1), (4, 8, 3, 2)]:
        key, kx, kw, kb = jax.random.split(key, 4)
        fan_in = c_in * k * k
        bound = 1.0 / (fan_in ** 0.5)
        weight = jax.random.uniform(kw, (c_out, c_in, k, k), jnp.float32,
                                    -bound, bound)
        bias = jax.random.uniform(kb, (c_out,), jnp.float32, -bound, bound)
        x = jax.random.normal(kx, (batch, c_in, spatial, spatial), jnp.float32)

        out = conv_layer_forward(x, weight, bias, kernel_size=k, stride=stride)
        out = jax.block_until_ready(out)

        ref_f32 = reference(x, weight, bias, k, stride, jnp.float32)
        ref_bf16 = reference(x, weight, bias, k, stride, jnp.bfloat16)

        assert out.shape == ref_f32.shape, (out.shape, ref_f32.shape)
        err_bf16 = float(jnp.max(jnp.abs(out - ref_bf16)))
        err_f32 = float(jnp.max(jnp.abs(out - ref_f32)))
        assert err_bf16 < 1e-3, (stride, err_bf16)   # same operand precision
        assert err_f32 < 5e-2, (stride, err_f32)     # bf16 operands vs f32 ref

    print("KERNEL_OK")
</pallas_src>

<mosaic_0001>
module attributes {stable_mosaic.version = 11 : i64} {
  func.func @_conv_kernel(%arg0: i32, %arg1: i32, %arg2: memref<1x1x8x2432xbf16, #tpu.memory_space<vmem>>, %arg3: memref<8x72xbf16, #tpu.memory_space<vmem>>, %arg4: memref<8x1xf32, #tpu.memory_space<vmem>>, %arg5: memref<1x1x8x2048xf32, #tpu.memory_space<vmem>>, %arg6: memref<72x2048xbf16, #tpu.memory_space<vmem>>) attributes {dimension_semantics = [#tpu.dimension_semantics<parallel>, #tpu.dimension_semantics<parallel>], iteration_bounds = array<i64: 2, 1>, scalar_prefetch = 0 : i64, scratch_operands = 1 : i64, tpu.core_type = #tpu.core_type<tc>, window_params = [{transform_indices = @transform_0, window_bounds = array<i64: 1, 1, 8, 2432>}, {pipeline_mode = #tpu.pipeline_mode<synchronous>, transform_indices = @transform_1, window_bounds = array<i64: 8, 72>}, {pipeline_mode = #tpu.pipeline_mode<synchronous>, transform_indices = @transform_2, window_bounds = array<i64: 8, 1>}, {transform_indices = @transform_3, window_bounds = array<i64: 1, 1, 8, 2048>}]} {
    %c0 = arith.constant 0 : index
    %c0_0 = arith.constant 0 : index
    %c0_1 = arith.constant 0 : index
    %c0_2 = arith.constant 0 : index
    %0 = vector.load %arg2[%c0, %c0_0, %c0_1, %c0_2] : memref<1x1x8x2432xbf16, #tpu.memory_space<vmem>>, vector<1x1x8x2048xbf16>
    %1 = vector.shape_cast %0 : vector<1x1x8x2048xbf16> to vector<8x2048xbf16>
    %c0_3 = arith.constant 0 : index
    %c0_4 = arith.constant 0 : index
    %2 = vector.load %arg6[%c0_3, %c0_4] : memref<72x2048xbf16, #tpu.memory_space<vmem>>, vector<8x2048xbf16>
    tpu.vector_store %arg6[%c0_3, %c0_4], %1 {strides = array<i32>} : memref<72x2048xbf16, #tpu.memory_space<vmem>>, vector<8x2048xbf16>,
    %c0_5 = arith.constant 0 : index
    %c0_6 = arith.constant 0 : index
    %c0_7 = arith.constant 0 : index
    %c1 = arith.constant 1 : index
    %3 = vector.load %arg2[%c0_5, %c0_6, %c0_7, %c1] : memref<1x1x8x2432xbf16, #tpu.memory_space<vmem>>, vector<1x1x8x2048xbf16>
    %4 = vector.shape_cast %3 : vector<1x1x8x2048xbf16> to vector<8x2048xbf16>
    %c8 = arith.constant 8 : index
    %c0_8 = arith.constant 0 : index
    %5 = vector.load %arg6[%c8, %c0_8] : memref<72x2048xbf16, #tpu.memory_space<vmem>>, vector<8x2048xbf16>
    tpu.vector_store %arg6[%c8, %c0_8], %4 {strides = array<i32>} : memref<72x2048xbf16, #tpu.memory_space<vmem>>, vector<8x2048xbf16>,
    %c0_9 = arith.constant 0 : index
    %c0_10 = arith.constant 0 : index
    %c0_11 = arith.constant 0 : index
    %c2 = arith.constant 2 : index
    %6 = vector.load %arg2[%c0_9, %c0_10, %c0_11, %c2] : memref<1x1x8x2432xbf16, #tpu.memory_space<vmem>>, vector<1x1x8x2048xbf16>
    %7 = vector.shape_cast %6 : vector<1x1x8x2048xbf16> to vector<8x2048xbf16>
    %c16 = arith.constant 16 : index
    %c0_12 = arith.constant 0 : index
    %8 = vector.load %arg6[%c16, %c0_12] : memref<72x2048xbf16, #tpu.memory_space<vmem>>, vector<8x2048xbf16>
    tpu.vector_store %arg6[%c16, %c0_12], %7 {strides = array<i32>} : memref<72x2048xbf16, #tpu.memory_space<vmem>>, vector<8x2048xbf16>,
    %c0_13 = arith.constant 0 : index
    %c0_14 = arith.constant 0 : index
    %c0_15 = arith.constant 0 : index
    %c128 = arith.constant 128 : index
    %9 = vector.load %arg2[%c0_13, %c0_14, %c0_15, %c128] : memref<1x1x8x2432xbf16, #tpu.memory_space<vmem>>, vector<1x1x8x2048xbf16>
    %10 = vector.shape_cast %9 : vector<1x1x8x2048xbf16> to vector<8x2048xbf16>
    %c24 = arith.constant 24 : index
    %c0_16 = arith.constant 0 : index
    %11 = vector.load %arg6[%c24, %c0_16] : memref<72x2048xbf16, #tpu.memory_space<vmem>>, vector<8x2048xbf16>
    tpu.vector_store %arg6[%c24, %c0_16], %10 {strides = array<i32>} : memref<72x2048xbf16, #tpu.memory_space<vmem>>, vector<8x2048xbf16>,
    %c0_17 = arith.constant 0 : index
    %c0_18 = arith.constant 0 : index
    %c0_19 = arith.constant 0 : index
    %c129 = arith.constant 129 : index
    %12 = vector.load %arg2[%c0_17, %c0_18, %c0_19, %c129] : memref<1x1x8x2432xbf16, #tpu.memory_space<vmem>>, vector<1x1x8x2048xbf16>
    %13 = vector.shape_cast %12 : vector<1x1x8x2048xbf16> to vector<8x2048xbf16>
    %c32 = arith.constant 32 : index
    %c0_20 = arith.constant 0 : index
    %14 = vector.load %arg6[%c32, %c0_20] : memref<72x2048xbf16, #tpu.memory_space<vmem>>, vector<8x2048xbf16>
    tpu.vector_store %arg6[%c32, %c0_20], %13 {strides = array<i32>} : memref<72x2048xbf16, #tpu.memory_space<vmem>>, vector<8x2048xbf16>,
    %c0_21 = arith.constant 0 : index
    %c0_22 = arith.constant 0 : index
    %c0_23 = arith.constant 0 : index
    %c130 = arith.constant 130 : index
    %15 = vector.load %arg2[%c0_21, %c0_22, %c0_23, %c130] : memref<1x1x8x2432xbf16, #tpu.memory_space<vmem>>, vector<1x1x8x2048xbf16>
    %16 = vector.shape_cast %15 : vector<1x1x8x2048xbf16> to vector<8x2048xbf16>
    %c40 = arith.constant 40 : index
    %c0_24 = arith.constant 0 : index
    %17 = vector.load %arg6[%c40, %c0_24] : memref<72x2048xbf16, #tpu.memory_space<vmem>>, vector<8x2048xbf16>
    tpu.vector_store %arg6[%c40, %c0_24], %16 {strides = array<i32>} : memref<72x2048xbf16, #tpu.memory_space<vmem>>, vector<8x2048xbf16>,
    %c0_25 = arith.constant 0 : index
    %c0_26 = arith.constant 0 : index
    %c0_27 = arith.constant 0 : index
    %c256 = arith.constant 256 : index
    %18 = vector.load %arg2[%c0_25, %c0_26, %c0_27, %c256] : memref<1x1x8x2432xbf16, #tpu.memory_space<vmem>>, vector<1x1x8x2048xbf16>
    %19 = vector.shape_cast %18 : vector<1x1x8x2048xbf16> to vector<8x2048xbf16>
    %c48 = arith.constant 48 : index
    %c0_28 = arith.constant 0 : index
    %20 = vector.load %arg6[%c48, %c0_28] : memref<72x2048xbf16, #tpu.memory_space<vmem>>, vector<8x2048xbf16>
    tpu.vector_store %arg6[%c48, %c0_28], %19 {strides = array<i32>} : memref<72x2048xbf16, #tpu.memory_space<vmem>>, vector<8x2048xbf16>,
    %c0_29 = arith.constant 0 : index
    %c0_30 = arith.constant 0 : index
    %c0_31 = arith.constant 0 : index
    %c257 = arith.constant 257 : index
    %21 = vector.load %arg2[%c0_29, %c0_30, %c0_31, %c257] : memref<1x1x8x2432xbf16, #tpu.memory_space<vmem>>, vector<1x1x8x2048xbf16>
    %22 = vector.shape_cast %21 : vector<1x1x8x2048xbf16> to vector<8x2048xbf16>
    %c56 = arith.constant 56 : index
    %c0_32 = arith.constant 0 : index
    %23 = vector.load %arg6[%c56, %c0_32] : memref<72x2048xbf16, #tpu.memory_space<vmem>>, vector<8x2048xbf16>
    tpu.vector_store %arg6[%c56, %c0_32], %22 {strides = array<i32>} : memref<72x2048xbf16, #tpu.memory_space<vmem>>, vector<8x2048xbf16>,
    %c0_33 = arith.constant 0 : index
    %c0_34 = arith.constant 0 : index
    %c0_35 = arith.constant 0 : index
    %c258 = arith.constant 258 : index
    %24 = vector.load %arg2[%c0_33, %c0_34, %c0_35, %c258] : memref<1x1x8x2432xbf16, #tpu.memory_space<vmem>>, vector<1x1x8x2048xbf16>
    %25 = vector.shape_cast %24 : vector<1x1x8x2048xbf16> to vector<8x2048xbf16>
    %c64 = arith.constant 64 : index
    %c0_36 = arith.constant 0 : index
    %26 = vector.load %arg6[%c64, %c0_36] : memref<72x2048xbf16, #tpu.memory_space<vmem>>, vector<8x2048xbf16>
    tpu.vector_store %arg6[%c64, %c0_36], %25 {strides = array<i32>} : memref<72x2048xbf16, #tpu.memory_space<vmem>>, vector<8x2048xbf16>,
    %c0_37 = arith.constant 0 : index
    %c0_38 = arith.constant 0 : index
    %27 = vector.load %arg3[%c0_37, %c0_38] : memref<8x72xbf16, #tpu.memory_space<vmem>>, vector<8x72xbf16>
    %c0_39 = arith.constant 0 : index
    %c0_40 = arith.constant 0 : index
    %28 = vector.load %arg6[%c0_39, %c0_40] : memref<72x2048xbf16, #tpu.memory_space<vmem>>, vector<72x2048xbf16>
    %cst = arith.constant dense<0.000000e+00> : vector<8x2048xf32>
    %29 = tpu.matmul %27, %28, %cst {dimension_numbers = #tpu.dot_dimension_numbers<[1], [0], [0], [1], [0, 0, 1, 1], [], []>} : vector<8x72xbf16>, vector<72x2048xbf16>, vector<8x2048xf32> -> vector<8x2048xf32>
    %c0_41 = arith.constant 0 : index
    %c0_42 = arith.constant 0 : index
    %30 = vector.load %arg4[%c0_41, %c0_42] : memref<8x1xf32, #tpu.memory_space<vmem>>, vector<8x1xf32>
    %31 = vector.broadcast %30 : vector<8x1xf32> to vector<8x2048xf32>
    %32 = arith.addf %29, %31 : vector<8x2048xf32>
    %c0_43 = arith.constant 0 : index
    %c0_44 = arith.constant 0 : index
    %c0_45 = arith.constant 0 : index
    %c0_46 = arith.constant 0 : index
    %33 = vector.load %arg5[%c0_43, %c0_44, %c0_45, %c0_46] : memref<1x1x8x2048xf32, #tpu.memory_space<vmem>>, vector<1x1x8x2048xf32>
    %34 = vector.shape_cast %33 : vector<1x1x8x2048xf32> to vector<8x2048xf32>
    %35 = vector.shape_cast %32 : vector<8x2048xf32> to vector<1x1x8x2048xf32>
    tpu.vector_store %arg5[%c0_43, %c0_44, %c0_45, %c0_46], %35 {strides = array<i32>} : memref<1x1x8x2048xf32, #tpu.memory_space<vmem>>, vector<1x1x8x2048xf32>,
    return
  }
  func.func @transform_0(%arg0: i32, %arg1: i32) -> (i32, i32, i32, i32) {
    %c0_i32 = arith.constant 0 : i32
    %c0_i32_0 = arith.constant 0 : i32
    %c0_i32_1 = arith.constant 0 : i32
    return %arg0, %arg1, %c0_i32, %c0_i32_0 : i32, i32, i32, i32
  }
  func.func @transform_1(%arg0: i32, %arg1: i32) -> (i32, i32) {
    %c0_i32 = arith.constant 0 : i32
    %c0_i32_0 = arith.constant 0 : i32
    %c0_i32_1 = arith.constant 0 : i32
    return %c0_i32, %c0_i32_0 : i32, i32
  }
  func.func @transform_2(%arg0: i32, %arg1: i32) -> (i32, i32) {
    %c0_i32 = arith.constant 0 : i32
    %c0_i32_0 = arith.constant 0 : i32
    %c0_i32_1 = arith.constant 0 : i32
    return %c0_i32, %c0_i32_0 : i32, i32
  }
  func.func @transform_3(%arg0: i32, %arg1: i32) -> (i32, i32, i32, i32) {
    %c0_i32 = arith.constant 0 : i32
    %c0_i32_0 = arith.constant 0 : i32
    %c0_i32_1 = arith.constant 0 : i32
    return %arg0, %arg1, %c0_i32, %c0_i32_0 : i32, i32, i32, i32
  }
}

</mosaic_0001>

<llo_original>
// kernel: conv_layer_forward.1
$region0: #{conv_layer_forward.1}
  #allocation0 [shape = 'u32[]', space=smem, size = 0x4, offset = 0x4, fixed_abs, tag = 'smem constant byte address 0x4 - core index']
  #allocation1 [shape = 'u32[144,128]{1,0:T(1,128)}', space=vmem, size = 0x12000, scoped, tag = 'internal scratch']
  #allocation2 [shape = 'bf16[72,2048]{1,0:T(8,128)(2,1)}', space=vmem, size = 0x48000, scoped, tag = 'scratch operand']
  %s0 = inlined_call_operand.vmem [shape: bf16[2,1,8,2432], index: 0, kind: input, shape index: {}]
  %s1 = inlined_call_operand.vmem [shape: bf16[8,72], index: 1, kind: input, shape index: {}]
  %s2 = inlined_call_operand.vmem [shape: f32[8,1], index: 2, kind: input, shape index: {}]
  %s3 = inlined_call_operand.vmem [shape: f32[2,1,8,2048], index: 3, kind: output, shape index: {}]
  %s4 = sld [smem:[#allocation0]]
  $region45: #{conv_layer_forward.1} parent=0
    _
  %s6 = ssub.s32 1, %s4
  %s7 = scalar_select 0, %s6, %s4
  loop: start=0, step=1, limit=4
  $region2: #{conv_layer_forward.1} parent=0 // loop_pre_header
    _
  $region3: #{conv_layer_forward.1} parent=0 // loop_header
    %s9 = sphi 0, %s13
    %p10 = scmp.ge.s32.totalorder %s9, 4
    %s16 = sphi 0, %s28
    %s17 = sphi 0, %s24
    %s18 = sphi 0, %s16
    %s19 = sphi 0, %s17
    %s20 = sphi 0, %s18
    %s21 = sphi 0, %s19
    %s33 = sphi 0, %s35
    %s36 = sphi 0, %s33
    %s37 = sphi 0, %s36
    %s53 = sphi 0, %s37
    %s57 = sphi 0, %s57
    %s59 = sphi 0, %s57
    %s60 = sphi 0, %s59
    %s74 = sphi 0, %s60
    %s78 = sphi 0, %s78
    %s80 = sphi 0, %s78
    %s81 = sphi 0, %s80
    %s95 = sphi 0, %s81
    %s103 = sphi 0, %s105
    %s106 = sphi 0, %s103
    %s107 = sphi 0, %s106
    %s123 = sphi 0, %s107
  $region4: #{conv_layer_forward.1} parent=0 // loop_header_branch
    %12 = sbr.rel (%p10) target = $region8
  $region5: #{conv_layer_forward.1} parent=0 // loop_body
    %s14 = ssub.s32 %s9, 1
    %s15 = ssub.s32 %s9, 2
    %s22 = sadd.s32 1, %s17
    %p23 = scmp.ge.s32.totalorder %s22, 1
    %s24 = scalar_select %p23, 0, %s22
    %s25 = sadd.s32 1, %s16
    %s26 = scalar_select %p23, %s25, %s16
    %p27 = scmp.ge.s32.totalorder %s26, 2
    %s28 = scalar_select %p27, 0, %s26
    %s29 = ssub.s32 %s16, %s28
    %s30 = ssub.s32 %s17, %s24
    %s31 = sor.u32 %s29, %s30
    %p32 = scmp.eq.s32.totalorder %s31, 0
    %s34 = sadd.s32 %s33, 1
    %s35 = scalar_select %p32, %s33, %s34
    %p38 = pneg %p32
    %p39 = scmp.eq.s32.totalorder %s9, 1
    %p40 = por %p38, %p39
    %p41 = scmp.ne.s32.totalorder %s33, %s36
    %p42 = scmp.eq.s32.totalorder %s9, 0
    %p43 = por %p41, %p42
    %p44 = scmp.ne.s32.totalorder %s33, %s36
    %p45 = scmp.eq.s32.totalorder %s14, 1
    %p46 = por %p44, %p45
    %p47 = scmp.ne.s32.totalorder %s36, %s37
    %p48 = scmp.eq.s32.totalorder %s14, 0
    %p49 = por %p47, %p48
    %p50 = scmp.ne.s32.totalorder %s36, %s37
    %p51 = scmp.eq.s32.totalorder %s15, 1
    %p52 = por %p50, %p51
    %p54 = scmp.ne.s32.totalorder %s37, %s53
    %p55 = scmp.eq.s32.totalorder %s15, 0
    %p56 = por %p54, %p55
    %s58 = sadd.s32 %s57, 1
    %p61 = scmp.eq.s32.totalorder %s9, 1
    %p62 = scmp.ne.s32.totalorder %s57, %s59
    %p63 = scmp.eq.s32.totalorder %s9, 0
    %p64 = por %p62, %p63
    %p65 = scmp.ne.s32.totalorder %s57, %s59
    %p66 = scmp.eq.s32.totalorder %s14, 1
    %p67 = por %p65, %p66
    %p68 = scmp.ne.s32.totalorder %s59, %s60
    %p69 = scmp.eq.s32.totalorder %s14, 0
    %p70 = por %p68, %p69
    %p71 = scmp.ne.s32.totalorder %s59, %s60
    %p72 = scmp.eq.s32.totalorder %s15, 1
    %p73 = por %p71, %p72
    %p75 = scmp.ne.s32.totalorder %s60, %s74
    %p76 = scmp.eq.s32.totalorder %s15, 0
    %p77 = por %p75, %p76
    %s79 = sadd.s32 %s78, 1
    %p82 = scmp.eq.s32.totalorder %s9, 1
    %p83 = scmp.ne.s32.totalorder %s78, %s80
    %p84 = scmp.eq.s32.totalorder %s9, 0
    %p85 = por %p83, %p84
    %p86 = scmp.ne.s32.totalorder %s78, %s80
    %p87 = scmp.eq.s32.totalorder %s14, 1
    %p88 = por %p86, %p87
    %p89 = scmp.ne.s32.totalorder %s80, %s81
    %p90 = scmp.eq.s32.totalorder %s14, 0
    %p91 = por %p89, %p90
    %p92 = scmp.ne.s32.totalorder %s80, %s81
    %p93 = scmp.eq.s32.totalorder %s15, 1
    %p94 = por %p92, %p93
    %p96 = scmp.ne.s32.totalorder %s81, %s95
    %p97 = scmp.eq.s32.totalorder %s15, 0
    %p98 = por %p96, %p97
    %s99 = ssub.s32 %s16, %s28
    %s100 = ssub.s32 %s17, %s24
    %s101 = sor.u32 %s99, %s100
    %p102 = scmp.eq.s32.totalorder %s101, 0
    %s104 = sadd.s32 %s103, 1
    %s105 = scalar_select %p102, %s103, %s104
    %p108 = pneg %p102
    %p109 = scmp.eq.s32.totalorder %s9, 1
    %p110 = por %p108, %p109
    %p111 = scmp.ne.s32.totalorder %s103, %s106
    %p112 = scmp.eq.s32.totalorder %s9, 0
    %p113 = por %p111, %p112
    %p114 = scmp.ne.s32.totalorder %s103, %s106
    %p115 = scmp.eq.s32.totalorder %s14, 1
    %p116 = por %p114, %p115
    %p117 = scmp.ne.s32.totalorder %s106, %s107
    %p118 = scmp.eq.s32.totalorder %s14, 0
    %p119 = por %p117, %p118
    %p120 = scmp.ne.s32.totalorder %s106, %s107
    %p121 = scmp.eq.s32.totalorder %s15, 1
    %p122 = por %p120, %p121
    %p124 = scmp.ne.s32.totalorder %s107, %s123
    %p125 = scmp.eq.s32.totalorder %s15, 0
    %p126 = por %p124, %p125
    %p127 = scmp.le.s32.totalorder 1, %s9
    %p128 = scmp.lt.s32.totalorder %s9, 3
    %p129 = pnand %p127, %p128
    %p130 = pneg %p129
    // Predicated region
    $region9: #{conv_layer_forward.1} parent=5 // pred_check
      _
    $region10: #{conv_layer_forward.1} parent=5 // pred_check_branch
      %132 = sbr.rel (%p129) target = $region12
    $region11: #{conv_layer_forward.1} parent=5 // pred_region
      %s133 = ssub.s32 %s9, 1
      // Predicated region
      $region13: #{conv_layer_forward.1} parent=11 // pred_check
        %p134 = pneg %p70
      $region14: #{conv_layer_forward.1} parent=11 // pred_check_branch
        %136 = sbr.rel (%p134) target = $region16
      $region15: #{conv_layer_forward.1} parent=11 // pred_region
        _
      $region16: #{conv_layer_forward.1} parent=11 // pred_fallthru
        _
      // Predicated region
      $region17: #{conv_layer_forward.1} parent=11 // pred_check
        %p137 = pneg %p91
      $region18: #{conv_layer_forward.1} parent=11 // pred_check_branch
        %139 = sbr.rel (%p137) target = $region20
      $region19: #{conv_layer_forward.1} parent=11 // pred_region
        _
      $region20: #{conv_layer_forward.1} parent=11 // pred_fallthru
        _
    $region12: #{conv_layer_forward.1} parent=5 // pred_fallthru
      _
    %p140 = scmp.lt.s32.totalorder %s9, 2
    // Predicated region
    $region21: #{conv_layer_forward.1} parent=5 // pred_check
      %p141 = pneg %p140
    $region22: #{conv_layer_forward.1} parent=5 // pred_check_branch
      %143 = sbr.rel (%p141) target = $region24
    $region23: #{conv_layer_forward.1} parent=5 // pred_region
      // Predicated region
      $region25: #{conv_layer_forward.1} parent=23 // pred_check
        %p144 = pneg %p43
      $region26: #{conv_layer_forward.1} parent=23 // pred_check_branch
        %146 = sbr.rel (%p144) target = $region28
      $region27: #{conv_layer_forward.1} parent=23 // pred_region
        %p147 = scmp.lt.s32.totalorder %s16, 1
        %s148 = scalar_select %p147, %s16, 1
        %p149 = scmp.lt.s32.totalorder %s17, 0
        %s150 = scalar_select %p149, %s17, 0
        %s151 = smul.addr %s150, 19
        %s152 = smul.addr %s148, 19
        %s153 = sadd.s32 %s151, %s152
        %s154 = smul.addr %s153, 4
        %s155 = scalar_lea.vmem %s0, %s154
      $region28: #{conv_layer_forward.1} parent=23 // pred_fallthru
        _
    $region24: #{conv_layer_forward.1} parent=5 // pred_fallthru
      _
    %p156 = scmp.le.s32.totalorder 1, %s9
    %p157 = scmp.lt.s32.totalorder %s9, 3
    %p158 = pnand %p156, %p157
    %p159 = pneg %p158
    // Predicated region
    $region29: #{conv_layer_forward.1} parent=5 // pred_check
      _
    $region30: #{conv_layer_forward.1} parent=5 // pred_check_branch
      %161 = sbr.rel (%p158) target = $region32
    $region31: #{conv_layer_forward.1} parent=5 // pred_region
      %s162 = ssub.s32 %s9, 1
      %p163 = scmp.lt.s32.totalorder %s18, 1
      %s164 = scalar_select %p163, %s18, 1
      %p165 = scmp.lt.s32.totalorder %s19, 0
      %s166 = scalar_select %p165, %s19, 0
      %s167 = smul.addr %s166, 19
      %s168 = smul.addr %s164, 19
      %s169 = sadd.s32 %s167, %s168
      %s170 = smul.addr %s169, 4
      %s171 = scalar_lea.vmem %s0, %s170
      %p172 = pneg %p49
      %p173 = pneg %p46
      %p174 = pneg %p70
      %p175 = pneg %p67
      %p176 = pneg %p91
      %p177 = pneg %p88
      %p178 = pneg %p119
      %p179 = pneg %p116
      %p180 = scmp.lt.s32.totalorder %s18, 1
      %s181 = scalar_select %p180, %s18, 1
      %p182 = scmp.lt.s32.totalorder %s19, 0
      %s183 = scalar_select %p182, %s19, 0
      %s184 = smul.addr %s183, 16
      %s185 = smul.addr %s181, 16
      %s186 = sadd.s32 %s184, %s185
      %s187 = smul.addr %s186, 8
      %s188 = scalar_lea.vmem %s3, %s187
      %p189 = scmp.lt.s32.totalorder %s18, 1
      %s190 = scalar_select %p189, %s18, 1
      %p191 = scmp.lt.s32.totalorder %s19, 0
      %s192 = scalar_select %p191, %s19, 0
      %s193 = smul.addr %s192, 19
      %s194 = smul.addr %s190, 19
      %s195 = sadd.s32 %s193, %s194
      %s196 = smul.addr %s195, 4
      %s197 = scalar_lea.vmem %s0, %s196
      %p198 = scmp.lt.s32.totalorder %s18, 1
      %s199 = scalar_select %p198, %s18, 1
      %p200 = scmp.lt.s32.totalorder %s19, 0
      %s201 = scalar_select %p200, %s19, 0
      %s202 = smul.addr %s201, 16
      %s203 = smul.addr %s199, 16
      %s204 = sadd.s32 %s202, %s203
      %s205 = smul.addr %s204, 8
      %s206 = scalar_lea.vmem %s3, %s205
      %v208 = vld [vmem:[%s197] sm:$0xff]
      %v209 = vld [vmem:[%s197 + $0x8] sm:$0xff]
      %v210 = vld [vmem:[%s197 + $0x10] sm:$0xff]
      %v211 = vld [vmem:[%s197 + $0x18] sm:$0xff]
      %v212 = vld [vmem:[%s197 + $0x20] sm:$0xff]
      %v213 = vld [vmem:[%s197 + $0x28] sm:$0xff]
      %v214 = vld [vmem:[%s197 + $0x30] sm:$0xff]
      %v215 = vld [vmem:[%s197 + $0x38] sm:$0xff]
      %216 = vst [vmem:[#allocation2] sm:$0xff] %v208
      %217 = vst [vmem:[#allocation2 + $0x8] sm:$0xff] %v209
      %218 = vst [vmem:[#allocation2 + $0x10] sm:$0xff] %v210
      %219 = vst [vmem:[#allocation2 + $0x18] sm:$0xff] %v211
      %220 = vst [vmem:[#allocation2 + $0x20] sm:$0xff] %v212
      %221 = vst [vmem:[#allocation2 + $0x28] sm:$0xff] %v213
      %222 = vst [vmem:[#allocation2 + $0x30] sm:$0xff] %v214
      %223 = vst [vmem:[#allocation2 + $0x38] sm:$0xff] %v215
      %v224 = vld [vmem:[%s197] sm:$0xff]
      %v225 = vld [vmem:[%s197 + $0x8] sm:$0xff]
      %v226 = vld [vmem:[%s197 + $0x10] sm:$0xff]
      %v227 = vld [vmem:[%s197 + $0x18] sm:$0xff]
      %v228 = vld [vmem:[%s197 + $0x20] sm:$0xff]
      %v229 = vld [vmem:[%s197 + $0x28] sm:$0xff]
      %v230 = vld [vmem:[%s197 + $0x30] sm:$0xff]
      %v231 = vld [vmem:[%s197 + $0x38] sm:$0xff]
      %v232 = vld [vmem:[%s197 + $0x40] sm:$0xf]
      %242 = vrot.lane.b32.xlu0 %v224, 127
      %v243 = vpop.permute.xlu0 %242
      %244 = vrot.lane.b32.xlu0 %v225, 127
      %v245 = vpop.permute.xlu0 %244
      %246 = vrot.lane.b32.xlu0 %v226, 127
      %v247 = vpop.permute.xlu0 %246
      %248 = vrot.lane.b32.xlu0 %v227, 127
      %v249 = vpop.permute.xlu0 %248
      %250 = vrot.lane.b32.xlu0 %v228, 127
      %v251 = vpop.permute.xlu0 %250
      %252 = vrot.lane.b32.xlu0 %v229, 127
      %v253 = vpop.permute.xlu0 %252
      %254 = vrot.lane.b32.xlu0 %v230, 127
      %v255 = vpop.permute.xlu0 %254
      %256 = vrot.lane.b32.xlu0 %v231, 127
      %v257 = vpop.permute.xlu0 %256
      %258 = vrot.lane.b32.xlu0 %v232, 127
      %v259 = vpop.permute.xlu0 %258
      %v260 = vrot.slane %v243, 4
      %v261 = vrot.slane %v245, 4
      %v262 = vrot.slane %v247, 4
      %v263 = vrot.slane %v249, 4
      %v264 = vrot.slane %v251, 4
      %v265 = vrot.slane %v253, 4
      %v266 = vrot.slane %v255, 4
      %v267 = vrot.slane %v257, 4
      %v268 = vrot.slane %v259, 4
      %vm269 = vcmask 1043456
      %v270 = vsel %vm269, %v260, %v261
      %vm271 = vcmask 1039360
      %v272 = vsel %vm271, %v243, %v270
      %v273 = vsel %vm269, %v261, %v262
      %v274 = vsel %vm271, %v245, %v273
      %v275 = vsel %vm269, %v262, %v263
      %v276 = vsel %vm271, %v247, %v275
      %v277 = vsel %vm269, %v263, %v264
      %v278 = vsel %vm271, %v249, %v277
      %v279 = vsel %vm269, %v264, %v265
      %v280 = vsel %vm271, %v251, %v279
      %v281 = vsel %vm269, %v265, %v266
      %v282 = vsel %vm271, %v253, %v281
      %v283 = vsel %vm269, %v266, %v267
      %v284 = vsel %vm271, %v255, %v283
      %v285 = vsel %vm269, %v267, %v268
      %v286 = vsel %vm271, %v257, %v285
      %295 = vst [vmem:[#allocation2 + $0x40] sm:$0xff] %v272
      %296 = vst [vmem:[#allocation2 + $0x48] sm:$0xff] %v274
      %297 = vst [vmem:[#allocation2 + $0x50] sm:$0xff] %v276
      %298 = vst [vmem:[#allocation2 + $0x58] sm:$0xff] %v278
      %299 = vst [vmem:[#allocation2 + $0x60] sm:$0xff] %v280
      %300 = vst [vmem:[#allocation2 + $0x68] sm:$0xff] %v282
      %301 = vst [vmem:[#allocation2 + $0x70] sm:$0xff] %v284
      %302 = vst [vmem:[#allocation2 + $0x78] sm:$0xff] %v286
      %v303 = vld [vmem:[%s197] sm:$0xff]
      %v304 = vld [vmem:[%s197 + $0x8] sm:$0xff]
      %v305 = vld [vmem:[%s197 + $0x10] sm:$0xff]
      %v306 = vld [vmem:[%s197 + $0x18] sm:$0xff]
      %v307 = vld [vmem:[%s197 + $0x20] sm:$0xff]
      %v308 = vld [vmem:[%s197 + $0x28] sm:$0xff]
      %v309 = vld [vmem:[%s197 + $0x30] sm:$0xff]
      %v310 = vld [vmem:[%s197 + $0x38] sm:$0xff]
      %v311 = vld [vmem:[%s197 + $0x40] sm:$0xf]
      %321 = vrot.lane.b32.xlu0 %v303, 126
      %v322 = vpop.permute.xlu0 %321
      %323 = vrot.lane.b32.xlu0 %v304, 126
      %v324 = vpop.permute.xlu0 %323
      %325 = vrot.lane.b32.xlu0 %v305, 126
      %v326 = vpop.permute.xlu0 %325
      %327 = vrot.lane.b32.xlu0 %v306, 126
      %v328 = vpop.permute.xlu0 %327
      %329 = vrot.lane.b32.xlu0 %v307, 126
      %v330 = vpop.permute.xlu0 %329
      %331 = vrot.lane.b32.xlu0 %v308, 126
      %v332 = vpop.permute.xlu0 %331
      %333 = vrot.lane.b32.xlu0 %v309, 126
      %v334 = vpop.permute.xlu0 %333
      %335 = vrot.lane.b32.xlu0 %v310, 126
      %v336 = vpop.permute.xlu0 %335
      %337 = vrot.lane.b32.xlu0 %v311, 126
      %v338 = vpop.permute.xlu0 %337
      %v339 = vrot.slane %v322, 4
      %v340 = vrot.slane %v324, 4
      %v341 = vrot.slane %v326, 4
      %v342 = vrot.slane %v328, 4
      %v343 = vrot.slane %v330, 4
      %v344 = vrot.slane %v332, 4
      %v345 = vrot.slane %v334, 4
      %v346 = vrot.slane %v336, 4
      %v347 = vrot.slane %v338, 4
      %v348 = vsel %vm269, %v339, %v340
      %vm349 = vcmask 1031168
      %v350 = vsel %vm349, %v322, %v348
      %v351 = vsel %vm269, %v340, %v341
      %v352 = vsel %vm349, %v324, %v351
      %v353 = vsel %vm269, %v341, %v342
      %v354 = vsel %vm349, %v326, %v353
      %v355 = vsel %vm269, %v342, %v343
      %v356 = vsel %vm349, %v328, %v355
      %v357 = vsel %vm269, %v343, %v344
      %v358 = vsel %vm349, %v330, %v357
      %v359 = vsel %vm269, %v344, %v345
      %v360 = vsel %vm349, %v332, %v359
      %v361 = vsel %vm269, %v345, %v346
      %v362 = vsel %vm349, %v334, %v361
      %v363 = vsel %vm269, %v346, %v347
      %v364 = vsel %vm349, %v336, %v363
      %373 = vst [vmem:[#allocation2 + $0x80] sm:$0xff] %v350
      %374 = vst [vmem:[#allocation2 + $0x88] sm:$0xff] %v352
      %375 = vst [vmem:[#allocation2 + $0x90] sm:$0xff] %v354
      %376 = vst [vmem:[#allocation2 + $0x98] sm:$0xff] %v356
      %377 = vst [vmem:[#allocation2 + $0xa0] sm:$0xff] %v358
      %378 = vst [vmem:[#allocation2 + $0xa8] sm:$0xff] %v360
      %379 = vst [vmem:[#allocation2 + $0xb0] sm:$0xff] %v362
      %380 = vst [vmem:[#allocation2 + $0xb8] sm:$0xff] %v364
      %v381 = vld [vmem:[%s197 + $0x4] sm:$0xff]
      %v382 = vld [vmem:[%s197 + $0xc] sm:$0xff]
      %v383 = vld [vmem:[%s197 + $0x14] sm:$0xff]
      %v384 = vld [vmem:[%s197 + $0x1c] sm:$0xff]
      %v385 = vld [vmem:[%s197 + $0x24] sm:$0xff]
      %v386 = vld [vmem:[%s197 + $0x2c] sm:$0xff]
      %v387 = vld [vmem:[%s197 + $0x34] sm:$0xff]
      %v388 = vld [vmem:[%s197 + $0x3c] sm:$0xff]
      %389 = vst [vmem:[#allocation2 + $0xc0] sm:$0xff] %v381
      %390 = vst [vmem:[#allocation2 + $0xc8] sm:$0xff] %v382
      %391 = vst [vmem:[#allocation2 + $0xd0] sm:$0xff] %v383
      %392 = vst [vmem:[#allocation2 + $0xd8] sm:$0xff] %v384
      %393 = vst [vmem:[#allocation2 + $0xe0] sm:$0xff] %v385
      %394 = vst [vmem:[#allocation2 + $0xe8] sm:$0xff] %v386
      %395 = vst [vmem:[#allocation2 + $0xf0] sm:$0xff] %v387
      %396 = vst [vmem:[#allocation2 + $0xf8] sm:$0xff] %v388
      %v397 = vld [vmem:[%s197 + $0x4] sm:$0xff]
      %v398 = vld [vmem:[%s197 + $0xc] sm:$0xff]
      %v399 = vld [vmem:[%s197 + $0x14] sm:$0xff]
      %v400 = vld [vmem:[%s197 + $0x1c] sm:$0xff]
      %v401 = vld [vmem:[%s197 + $0x24] sm:$0xff]
      %v402 = vld [vmem:[%s197 + $0x2c] sm:$0xff]
      %v403 = vld [vmem:[%s197 + $0x34] sm:$0xff]
      %v404 = vld [vmem:[%s197 + $0x3c] sm:$0xff]
      %v405 = vld [vmem:[%s197 + $0x44] sm:$0xf]
      %415 = vrot.lane.b32.xlu0 %v397, 127
      %v416 = vpop.permute.xlu0 %415
      %417 = vrot.lane.b32.xlu0 %v398, 127
      %v418 = vpop.permute.xlu0 %417
      %419 = vrot.lane.b32.xlu0 %v399, 127
      %v420 = vpop.permute.xlu0 %419
      %421 = vrot.lane.b32.xlu0 %v400, 127
      %v422 = vpop.permute.xlu0 %421
      %423 = vrot.lane.b32.xlu0 %v401, 127
      %v424 = vpop.permute.xlu0 %423
      %425 = vrot.lane.b32.xlu0 %v402, 127
      %v426 = vpop.permute.xlu0 %425
      %427 = vrot.lane.b32.xlu0 %v403, 127
      %v428 = vpop.permute.xlu0 %427
      %429 = vrot.lane.b32.xlu0 %v404, 127
      %v430 = vpop.permute.xlu0 %429
      %431 = vrot.lane.b32.xlu0 %v405, 127
      %v432 = vpop.permute.xlu0 %431
      %v433 = vrot.slane %v416, 4
      %v434 = vrot.slane %v418, 4
      %v435 = vrot.slane %v420, 4
      %v436 = vrot.slane %v422, 4
      %v437 = vrot.slane %v424, 4
      %v438 = vrot.slane %v426, 4
      %v439 = vrot.slane %v428, 4
      %v440 = vrot.slane %v430, 4
      %v441 = vrot.slane %v432, 4
      %v442 = vsel %vm269, %v433, %v434
      %v443 = vsel %vm271, %v416, %v442
      %v444 = vsel %vm269, %v434, %v435
      %v445 = vsel %vm271, %v418, %v444
      %v446 = vsel %vm269, %v435, %v436
      %v447 = vsel %vm271, %v420, %v446
      %v448 = vsel %vm269, %v436, %v437
      %v449 = vsel %vm271, %v422, %v448
      %v450 = vsel %vm269, %v437, %v438
      %v451 = vsel %vm271, %v424, %v450
      %v452 = vsel %vm269, %v438, %v439
      %v453 = vsel %vm271, %v426, %v452
      %v454 = vsel %vm269, %v439, %v440
      %v455 = vsel %vm271, %v428, %v454
      %v456 = vsel %vm269, %v440, %v441
      %v457 = vsel %vm271, %v430, %v456
      %466 = vst [vmem:[#allocation2 + $0x100] sm:$0xff] %v443
      %467 = vst [vmem:[#allocation2 + $0x108] sm:$0xff] %v445
      %468 = vst [vmem:[#allocation2 + $0x110] sm:$0xff] %v447
      %469 = vst [vmem:[#allocation2 + $0x118] sm:$0xff] %v449
      %470 = vst [vmem:[#allocation2 + $0x120] sm:$0xff] %v451
      %471 = vst [vmem:[#allocation2 + $0x128] sm:$0xff] %v453
      %472 = vst [vmem:[#allocation2 + $0x130] sm:$0xff] %v455
      %473 = vst [vmem:[#allocation2 + $0x138] sm:$0xff] %v457
      %v474 = vld [vmem:[%s197 + $0x4] sm:$0xff]
      %v475 = vld [vmem:[%s197 + $0xc] sm:$0xff]
      %v476 = vld [vmem:[%s197 + $0x14] sm:$0xff]
      %v477 = vld [vmem:[%s197 + $0x1c] sm:$0xff]
      %v478 = vld [vmem:[%s197 + $0x24] sm:$0xff]
      %v479 = vld [vmem:[%s197 + $0x2c] sm:$0xff]
      %v480 = vld [vmem:[%s197 + $0x34] sm:$0xff]
      %v481 = vld [vmem:[%s197 + $0x3c] sm:$0xff]
      %v482 = vld [vmem:[%s197 + $0x44] sm:$0xf]
      %492 = vrot.lane.b32.xlu0 %v474, 126
      %v493 = vpop.permute.xlu0 %492
      %494 = vrot.lane.b32.xlu0 %v475, 126
      %v495 = vpop.permute.xlu0 %494
      %496 = vrot.lane.b32.xlu0 %v476, 126
      %v497 = vpop.permute.xlu0 %496
      %498 = vrot.lane.b32.xlu0 %v477, 126
      %v499 = vpop.permute.xlu0 %498
      %500 = vrot.lane.b32.xlu0 %v478, 126
      %v501 = vpop.permute.xlu0 %500
      %502 = vrot.lane.b32.xlu0 %v479, 126
      %v503 = vpop.permute.xlu0 %502
      %504 = vrot.lane.b32.xlu0 %v480, 126
      %v505 = vpop.permute.xlu0 %504
      %506 = vrot.lane.b32.xlu0 %v481, 126
      %v507 = vpop.permute.xlu0 %506
      %508 = vrot.lane.b32.xlu0 %v482, 126
      %v509 = vpop.permute.xlu0 %508
      %v510 = vrot.slane %v493, 4
      %v511 = vrot.slane %v495, 4
      %v512 = vrot.slane %v497, 4
      %v513 = vrot.slane %v499, 4
      %v514 = vrot.slane %v501, 4
      %v515 = vrot.slane %v503, 4
      %v516 = vrot.slane %v505, 4
      %v517 = vrot.slane %v507, 4
      %v518 = vrot.slane %v509, 4
      %v519 = vsel %vm269, %v510, %v511
      %v520 = vsel %vm349, %v493, %v519
      %v521 = vsel %vm269, %v511, %v512
      %v522 = vsel %vm349, %v495, %v521
      %v523 = vsel %vm269, %v512, %v513
      %v524 = vsel %vm349, %v497, %v523
      %v525 = vsel %vm269, %v513, %v514
      %v526 = vsel %vm349, %v499, %v525
      %v527 = vsel %vm269, %v514, %v515
      %v528 = vsel %vm349, %v501, %v527
      %v529 = vsel %vm269, %v515, %v516
      %v530 = vsel %vm349, %v503, %v529
      %v531 = vsel %vm269, %v516, %v517
      %v532 = vsel %vm349, %v505, %v531
      %v533 = vsel %vm269, %v517, %v518
      %v534 = vsel %vm349, %v507, %v533
      %543 = vst [vmem:[#allocation2 + $0x140] sm:$0xff] %v520
      %544 = vst [vmem:[#allocation2 + $0x148] sm:$0xff] %v522
      %545 = vst [vmem:[#allocation2 + $0x150] sm:$0xff] %v524
      %546 = vst [vmem:[#allocation2 + $0x158] sm:$0xff] %v526
      %547 = vst [vmem:[#allocation2 + $0x160] sm:$0xff] %v528
      %548 = vst [vmem:[#allocation2 + $0x168] sm:$0xff] %v530
      %549 = vst [vmem:[#allocation2 + $0x170] sm:$0xff] %v532
      %550 = vst [vmem:[#allocation2 + $0x178] sm:$0xff] %v534
      %v551 = vld [vmem:[%s197 + $0x8] sm:$0xff]
      %v552 = vld [vmem:[%s197 + $0x10] sm:$0xff]
      %v553 = vld [vmem:[%s197 + $0x18] sm:$0xff]
      %v554 = vld [vmem:[%s197 + $0x20] sm:$0xff]
      %v555 = vld [vmem:[%s197 + $0x28] sm:$0xff]
      %v556 = vld [vmem:[%s197 + $0x30] sm:$0xff]
      %v557 = vld [vmem:[%s197 + $0x38] sm:$0xff]
      %v558 = vld [vmem:[%s197 + $0x40] sm:$0xff]
      %559 = vst [vmem:[#allocation2 + $0x180] sm:$0xff] %v551
      %560 = vst [vmem:[#allocation2 + $0x188] sm:$0xff] %v552
      %561 = vst [vmem:[#allocation2 + $0x190] sm:$0xff] %v553
      %562 = vst [vmem:[#allocation2 + $0x198] sm:$0xff] %v554
      %563 = vst [vmem:[#allocation2 + $0x1a0] sm:$0xff] %v555
      %564 = vst [vmem:[#allocation2 + $0x1a8] sm:$0xff] %v556
      %565 = vst [vmem:[#allocation2 + $0x1b0] sm:$0xff] %v557
      %566 = vst [vmem:[#allocation2 + $0x1b8] sm:$0xff] %v558
      %v567 = vld [vmem:[%s197 + $0x8] sm:$0xff]
      %v568 = vld [vmem:[%s197 + $0x10] sm:$0xff]
      %v569 = vld [vmem:[%s197 + $0x18] sm:$0xff]
      %v570 = vld [vmem:[%s197 + $0x20] sm:$0xff]
      %v571 = vld [vmem:[%s197 + $0x28] sm:$0xff]
      %v572 = vld [vmem:[%s197 + $0x30] sm:$0xff]
      %v573 = vld [vmem:[%s197 + $0x38] sm:$0xff]
      %v574 = vld [vmem:[%s197 + $0x40] sm:$0xff]
      %v575 = vld [vmem:[%s197 + $0x48] sm:$0xf]
      %585 = vrot.lane.b32.xlu0 %v567, 127
      %v586 = vpop.permute.xlu0 %585
      %587 = vrot.lane.b32.xlu0 %v568, 127
      %v588 = vpop.permute.xlu0 %587
      %589 = vrot.lane.b32.xlu0 %v569, 127
      %v590 = vpop.permute.xlu0 %589
      %591 = vrot.lane.b32.xlu0 %v570, 127
      %v592 = vpop.permute.xlu0 %591
      %593 = vrot.lane.b32.xlu0 %v571, 127
      %v594 = vpop.permute.xlu0 %593
      %595 = vrot.lane.b32.xlu0 %v572, 127
      %v596 = vpop.permute.xlu0 %595
      %597 = vrot.lane.b32.xlu0 %v573, 127
      %v598 = vpop.permute.xlu0 %597
      %599 = vrot.lane.b32.xlu0 %v574, 127
      %v600 = vpop.permute.xlu0 %599
      %601 = vrot.lane.b32.xlu0 %v575, 127
      %v602 = vpop.permute.xlu0 %601
      %v603 = vrot.slane %v586, 4
      %v604 = vrot.slane %v588, 4
      %v605 = vrot.slane %v590, 4
      %v606 = vrot.slane %v592, 4
      %v607 = vrot.slane %v594, 4
      %v608 = vrot.slane %v596, 4
      %v609 = vrot.slane %v598, 4
      %v610 = vrot.slane %v600, 4
      %v611 = vrot.slane %v602, 4
      %v612 = vsel %vm269, %v603, %v604
      %v613 = vsel %vm271, %v586, %v612
      %v614 = vsel %vm269, %v604, %v605
      %v615 = vsel %vm271, %v588, %v614
      %v616 = vsel %vm269, %v605, %v606
      %v617 = vsel %vm271, %v590, %v616
      %v618 = vsel %vm269, %v606, %v607
      %v619 = vsel %vm271, %v592, %v618
      %v620 = vsel %vm269, %v607, %v608
      %v621 = vsel %vm271, %v594, %v620
      %v622 = vsel %vm269, %v608, %v609
      %v623 = vsel %vm271, %v596, %v622
      %v624 = vsel %vm269, %v609, %v610
      %v625 = vsel %vm271, %v598, %v624
      %v626 = vsel %vm269, %v610, %v611
      %v627 = vsel %vm271, %v600, %v626
      %636 = vst [vmem:[#allocation2 + $0x1c0] sm:$0xff] %v613
      %637 = vst [vmem:[#allocation2 + $0x1c8] sm:$0xff] %v615
      %638 = vst [vmem:[#allocation2 + $0x1d0] sm:$0xff] %v617
      %639 = vst [vmem:[#allocation2 + $0x1d8] sm:$0xff] %v619
      %640 = vst [vmem:[#allocation2 + $0x1e0] sm:$0xff] %v621
      %641 = vst [vmem:[#allocation2 + $0x1e8] sm:$0xff] %v623
      %642 = vst [vmem:[#allocation2 + $0x1f0] sm:$0xff] %v625
      %643 = vst [vmem:[#allocation2 + $0x1f8] sm:$0xff] %v627
      %v644 = vld [vmem:[%s197 + $0x8] sm:$0xff]
      %v645 = vld [vmem:[%s197 + $0x10] sm:$0xff]
      %v646 = vld [vmem:[%s197 + $0x18] sm:$0xff]
      %v647 = vld [vmem:[%s197 + $0x20] sm:$0xff]
      %v648 = vld [vmem:[%s197 + $0x28] sm:$0xff]
      %v649 = vld [vmem:[%s197 + $0x30] sm:$0xff]
      %v650 = vld [vmem:[%s197 + $0x38] sm:$0xff]
      %v651 = vld [vmem:[%s197 + $0x40] sm:$0xff]
      %v652 = vld [vmem:[%s197 + $0x48] sm:$0xf]
      %662 = vrot.lane.b32.xlu0 %v644, 126
      %v663 = vpop.permute.xlu0 %662
      %664 = vrot.lane.b32.xlu0 %v645, 126
      %v665 = vpop.permute.xlu0 %664
      %666 = vrot.lane.b32.xlu0 %v646, 126
      %v667 = vpop.permute.xlu0 %666
      %668 = vrot.lane.b32.xlu0 %v647, 126
      %v669 = vpop.permute.xlu0 %668
      %670 = vrot.lane.b32.xlu0 %v648, 126
      %v671 = vpop.permute.xlu0 %670
      %672 = vrot.lane.b32.xlu0 %v649, 126
      %v673 = vpop.permute.xlu0 %672
      %674 = vrot.lane.b32.xlu0 %v650, 126
      %v675 = vpop.permute.xlu0 %674
      %676 = vrot.lane.b32.xlu0 %v651, 126
      %v677 = vpop.permute.xlu0 %676
      %678 = vrot.lane.b32.xlu0 %v652, 126
      %v679 = vpop.permute.xlu0 %678
      %v680 = vrot.slane %v663, 4
      %v681 = vrot.slane %v665, 4
      %v682 = vrot.slane %v667, 4
      %v683 = vrot.slane %v669, 4
      %v684 = vrot.slane %v671, 4
      %v685 = vrot.slane %v673, 4
      %v686 = vrot.slane %v675, 4
      %v687 = vrot.slane %v677, 4
      %v688 = vrot.slane %v679, 4
      %v689 = vsel %vm269, %v680, %v681
      %v690 = vsel %vm349, %v663, %v689
      %v691 = vsel %vm269, %v681, %v682
      %v692 = vsel %vm349, %v665, %v691
      %v693 = vsel %vm269, %v682, %v683
      %v694 = vsel %vm349, %v667, %v693
      %v695 = vsel %vm269, %v683, %v684
      %v696 = vsel %vm349, %v669, %v695
      %v697 = vsel %vm269, %v684, %v685
      %v698 = vsel %vm349, %v671, %v697
      %v699 = vsel %vm269, %v685, %v686
      %v700 = vsel %vm349, %v673, %v699
      %v701 = vsel %vm269, %v686, %v687
      %v702 = vsel %vm349, %v675, %v701
      %v703 = vsel %vm269, %v687, %v688
      %v704 = vsel %vm349, %v677, %v703
      %713 = vst [vmem:[#allocation2 + $0x200] sm:$0xff] %v690
      %714 = vst [vmem:[#allocation2 + $0x208] sm:$0xff] %v692
      %715 = vst [vmem:[#allocation2 + $0x210] sm:$0xff] %v694
      %716 = vst [vmem:[#allocation2 + $0x218] sm:$0xff] %v696
      %717 = vst [vmem:[#allocation2 + $0x220] sm:$0xff] %v698
      %718 = vst [vmem:[#allocation2 + $0x228] sm:$0xff] %v700
      %719 = vst [vmem:[#allocation2 + $0x230] sm:$0xff] %v702
      %720 = vst [vmem:[#allocation2 + $0x238] sm:$0xff] %v704
      %v721 = vld [vmem:[%s1] sm:$0xf]
      %v722 = vld [vmem:[#allocation2] sm:$0xff]
      %v723 = vld [vmem:[#allocation2 + $0x8] sm:$0xff]
      %v724 = vld [vmem:[#allocation2 + $0x10] sm:$0xff]
      %v725 = vld [vmem:[#allocation2 + $0x18] sm:$0xff]
      %v726 = vld [vmem:[#allocation2 + $0x20] sm:$0xff]
      %v727 = vld [vmem:[#allocation2 + $0x28] sm:$0xff]
      %v728 = vld [vmem:[#allocation2 + $0x30] sm:$0xff]
      %v729 = vld [vmem:[#allocation2 + $0x38] sm:$0xff]
      %v730 = vld [vmem:[#allocation2 + $0x40] sm:$0xff]
      %v731 = vld [vmem:[#allocation2 + $0x48] sm:$0xff]
      %v732 = vld [vmem:[#allocation2 + $0x50] sm:$0xff]
      %v733 = vld [vmem:[#allocation2 + $0x58] sm:$0xff]
      %v734 = vld [vmem:[#allocation2 + $0x60] sm:$0xff]
      %v735 = vld [vmem:[#allocation2 + $0x68] sm:$0xff]
      %v736 = vld [vmem:[#allocation2 + $0x70] sm:$0xff]
      %v737 = vld [vmem:[#allocation2 + $0x78] sm:$0xff]
      %v738 = vld [vmem:[#allocation2 + $0x80] sm:$0xff]
      %v739 = vld [vmem:[#allocation2 + $0x88] sm:$0xff]
      %v740 = vld [vmem:[#allocation2 + $0x90] sm:$0xff]
      %v741 = vld [vmem:[#allocation2 + $0x98] sm:$0xff]
      %v742 = vld [vmem:[#allocation2 + $0xa0] sm:$0xff]
      %v743 = vld [vmem:[#allocation2 + $0xa8] sm:$0xff]
      %v744 = vld [vmem:[#allocation2 + $0xb0] sm:$0xff]
      %v745 = vld [vmem:[#allocation2 + $0xb8] sm:$0xff]
      %v746 = vld [vmem:[#allocation2 + $0xc0] sm:$0xff]
      %v747 = vld [vmem:[#allocation2 + $0xc8] sm:$0xff]
      %v748 = vld [vmem:[#allocation2 + $0xd0] sm:$0xff]
      %v749 = vld [vmem:[#allocation2 + $0xd8] sm:$0xff]
      %v750 = vld [vmem:[#allocation2 + $0xe0] sm:$0xff]
      %v751 = vld [vmem:[#allocation2 + $0xe8] sm:$0xff]
      %v752 = vld [vmem:[#allocation2 + $0xf0] sm:$0xff]
      %v753 = vld [vmem:[#allocation2 + $0xf8] sm:$0xff]
      %v754 = vld [vmem:[#allocation2 + $0x100] sm:$0xff]
      %v755 = vld [vmem:[#allocation2 + $0x108] sm:$0xff]
      %v756 = vld [vmem:[#allocation2 + $0x110] sm:$0xff]
      %v757 = vld [vmem:[#allocation2 + $0x118] sm:$0xff]
      %v758 = vld [vmem:[#allocation2 + $0x120] sm:$0xff]
      %v759 = vld [vmem:[#allocation2 + $0x128] sm:$0xff]
      %v760 = vld [vmem:[#allocation2 + $0x130] sm:$0xff]
      %v761 = vld [vmem:[#allocation2 + $0x138] sm:$0xff]
      %v762 = vld [vmem:[#allocation2 + $0x140] sm:$0xff]
      %v763 = vld [vmem:[#allocation2 + $0x148] sm:$0xff]
      %v764 = vld [vmem:[#allocation2 + $0x150] sm:$0xff]
      %v765 = vld [vmem:[#allocation2 + $0x158] sm:$0xff]
      %v766 = vld [vmem:[#allocation2 + $0x160] sm:$0xff]
      %v767 = vld [vmem:[#allocation2 + $0x168] sm:$0xff]
      %v768 = vld [vmem:[#allocation2 + $0x170] sm:$0xff]
      %v769 = vld [vmem:[#allocation2 + $0x178] sm:$0xff]
      %v770 = vld [vmem:[#allocation2 + $0x180] sm:$0xff]
      %v771 = vld [vmem:[#allocation2 + $0x188] sm:$0xff]
      %v772 = vld [vmem:[#allocation2 + $0x190] sm:$0xff]
      %v773 = vld [vmem:[#allocation2 + $0x198] sm:$0xff]
      %v774 = vld [vmem:[#allocation2 + $0x1a0] sm:$0xff]
      %v775 = vld [vmem:[#allocation2 + $0x1a8] sm:$0xff]
      %v776 = vld [vmem:[#allocation2 + $0x1b0] sm:$0xff]
      %v777 = vld [vmem:[#allocation2 + $0x1b8] sm:$0xff]
      %v778 = vld [vmem:[#allocation2 + $0x1c0] sm:$0xff]
      %v779 = vld [vmem:[#allocation2 + $0x1c8] sm:$0xff]
      %v780 = vld [vmem:[#allocation2 + $0x1d0] sm:$0xff]
      %v781 = vld [vmem:[#allocation2 + $0x1d8] sm:$0xff]
      %v782 = vld [vmem:[#allocation2 + $0x1e0] sm:$0xff]
      %v783 = vld [vmem:[#allocation2 + $0x1e8] sm:$0xff]
      %v784 = vld [vmem:[#allocation2 + $0x1f0] sm:$0xff]
      %v785 = vld [vmem:[#allocation2 + $0x1f8] sm:$0xff]
      %v786 = vld [vmem:[#allocation2 + $0x200] sm:$0xff]
      %v787 = vld [vmem:[#allocation2 + $0x208] sm:$0xff]
      %v788 = vld [vmem:[#allocation2 + $0x210] sm:$0xff]
      %v789 = vld [vmem:[#allocation2 + $0x218] sm:$0xff]
      %v790 = vld [vmem:[#allocation2 + $0x220] sm:$0xff]
      %v791 = vld [vmem:[#allocation2 + $0x228] sm:$0xff]
      %v792 = vld [vmem:[#allocation2 + $0x230] sm:$0xff]
      %v793 = vld [vmem:[#allocation2 + $0x238] sm:$0xff]
      %v794 = vld [vmem:[%s2] sm:$0xff]
      %796 = vset.pattern.permute.xlu0 0
      %797 = vperm.xlu0 %796, %v794
      %v798 = vpop.permute.xlu0 %797
      %v872 = vunpack.c.l.b16 %v722
      %v873 = vunpack.c.h.b16 %v722
      %v874 = vunpack.c.l.b16 %v723
      %v875 = vunpack.c.h.b16 %v723
      %v876 = vunpack.c.l.b16 %v724
      %v877 = vunpack.c.h.b16 %v724
      %v878 = vunpack.c.l.b16 %v725
      %v879 = vunpack.c.h.b16 %v725
      %v880 = vunpack.c.l.b16 %v726
      %v881 = vunpack.c.h.b16 %v726
      %v882 = vunpack.c.l.b16 %v727
      %v883 = vunpack.c.h.b16 %v727
      %v884 = vunpack.c.l.b16 %v728
      %v885 = vunpack.c.h.b16 %v728
      %v886 = vunpack.c.l.b16 %v729
      %v887 = vunpack.c.h.b16 %v729
      %v888 = vunpack.c.l.b16 %v730
      %v889 = vunpack.c.h.b16 %v730
      %v890 = vunpack.c.l.b16 %v731
      %v891 = vunpack.c.h.b16 %v731
      %v892 = vunpack.c.l.b16 %v732
      %v893 = vunpack.c.h.b16 %v732
      %v894 = vunpack.c.l.b16 %v733
      %v895 = vunpack.c.h.b16 %v733
      %v896 = vunpack.c.l.b16 %v734
      %v897 = vunpack.c.h.b16 %v734
      %v898 = vunpack.c.l.b16 %v735
      %v899 = vunpack.c.h.b16 %v735
      %v900 = vunpack.c.l.b16 %v736
      %v901 = vunpack.c.h.b16 %v736
      %v902 = vunpack.c.l.b16 %v737
      %v903 = vunpack.c.h.b16 %v737
      %v904 = vunpack.c.l.b16 %v738
      %v905 = vunpack.c.h.b16 %v738
      %v906 = vunpack.c.l.b16 %v739
      %v907 = vunpack.c.h.b16 %v739
      %v908 = vunpack.c.l.b16 %v740
      %v909 = vunpack.c.h.b16 %v740
      %v910 = vunpack.c.l.b16 %v741
      %v911 = vunpack.c.h.b16 %v741
      %v912 = vunpack.c.l.b16 %v742
      %v913 = vunpack.c.h.b16 %v742
      %v914 = vunpack.c.l.b16 %v743
      %v915 = vunpack.c.h.b16 %v743
      %v916 = vunpack.c.l.b16 %v744
      %v917 = vunpack.c.h.b16 %v744
      %v918 = vunpack.c.l.b16 %v745
      %v919 = vunpack.c.h.b16 %v745
      %v920 = vunpack.c.l.b16 %v746
      %v921 = vunpack.c.h.b16 %v746
      %v922 = vunpack.c.l.b16 %v747
      %v923 = vunpack.c.h.b16 %v747
      %v924 = vunpack.c.l.b16 %v748
      %v925 = vunpack.c.h.b16 %v748
      %v926 = vunpack.c.l.b16 %v749
      %v927 = vunpack.c.h.b16 %v749
      %v928 = vunpack.c.l.b16 %v750
      %v929 = vunpack.c.h.b16 %v750
      %v930 = vunpack.c.l.b16 %v751
      %v931 = vunpack.c.h.b16 %v751
      %v932 = vunpack.c.l.b16 %v752
      %v933 = vunpack.c.h.b16 %v752
      %v934 = vunpack.c.l.b16 %v753
      %v935 = vunpack.c.h.b16 %v753
      %v936 = vunpack.c.l.b16 %v754
      %v937 = vunpack.c.h.b16 %v754
      %v938 = vunpack.c.l.b16 %v755
      %v939 = vunpack.c.h.b16 %v755
      %v940 = vunpack.c.l.b16 %v756
      %v941 = vunpack.c.h.b16 %v756
      %v942 = vunpack.c.l.b16 %v757
      %v943 = vunpack.c.h.b16 %v757
      %v944 = vunpack.c.l.b16 %v758
      %v945 = vunpack.c.h.b16 %v758
      %v946 = vunpack.c.l.b16 %v759
      %v947 = vunpack.c.h.b16 %v759
      %v948 = vunpack.c.l.b16 %v760
      %v949 = vunpack.c.h.b16 %v760
      %v950 = vunpack.c.l.b16 %v761
      %v951 = vunpack.c.h.b16 %v761
      %v952 = vunpack.c.l.b16 %v762
      %v953 = vunpack.c.h.b16 %v762
      %v954 = vunpack.c.l.b16 %v763
      %v955 = vunpack.c.h.b16 %v763
      %v956 = vunpack.c.l.b16 %v764
      %v957 = vunpack.c.h.b16 %v764
      %v958 = vunpack.c.l.b16 %v765
      %v959 = vunpack.c.h.b16 %v765
      %v960 = vunpack.c.l.b16 %v766
      %v961 = vunpack.c.h.b16 %v766
      %v962 = vunpack.c.l.b16 %v767
      %v963 = vunpack.c.h.b16 %v767
      %v964 = vunpack.c.l.b16 %v768
      %v965 = vunpack.c.h.b16 %v768
      %v966 = vunpack.c.l.b16 %v769
      %v967 = vunpack.c.h.b16 %v769
      %v968 = vunpack.c.l.b16 %v770
      %v969 = vunpack.c.h.b16 %v770
      %v970 = vunpack.c.l.b16 %v771
      %v971 = vunpack.c.h.b16 %v771
      %v972 = vunpack.c.l.b16 %v772
      %v973 = vunpack.c.h.b16 %v772
      %v974 = vunpack.c.l.b16 %v773
      %v975 = vunpack.c.h.b16 %v773
      %v976 = vunpack.c.l.b16 %v774
      %v977 = vunpack.c.h.b16 %v774
      %v978 = vunpack.c.l.b16 %v775
      %v979 = vunpack.c.h.b16 %v775
      %v980 = vunpack.c.l.b16 %v776
      %v981 = vunpack.c.h.b16 %v776
      %v982 = vunpack.c.l.b16 %v777
      %v983 = vunpack.c.h.b16 %v777
      %v984 = vunpack.c.l.b16 %v778
      %v985 = vunpack.c.h.b16 %v778
      %v986 = vunpack.c.l.b16 %v779
      %v987 = vunpack.c.h.b16 %v779
      %v988 = vunpack.c.l.b16 %v780
      %v989 = vunpack.c.h.b16 %v780
      %v990 = vunpack.c.l.b16 %v781
      %v991 = vunpack.c.h.b16 %v781
      %v992 = vunpack.c.l.b16 %v782
      %v993 = vunpack.c.h.b16 %v782
      %v994 = vunpack.c.l.b16 %v783
      %v995 = vunpack.c.h.b16 %v783
      %v996 = vunpack.c.l.b16 %v784
      %v997 = vunpack.c.h.b16 %v784
      %v998 = vunpack.c.l.b16 %v785
      %v999 = vunpack.c.h.b16 %v785
      %v1000 = vunpack.c.l.b16 %v786
      %v1001 = vunpack.c.h.b16 %v786
      %v1002 = vunpack.c.l.b16 %v787
      %v1003 = vunpack.c.h.b16 %v787
      %v1004 = vunpack.c.l.b16 %v788
      %v1005 = vunpack.c.h.b16 %v788
      %v1006 = vunpack.c.l.b16 %v789
      %v1007 = vunpack.c.h.b16 %v789
      %v1008 = vunpack.c.l.b16 %v790
      %v1009 = vunpack.c.h.b16 %v790
      %v1010 = vunpack.c.l.b16 %v791
      %v1011 = vunpack.c.h.b16 %v791
      %v1012 = vunpack.c.l.b16 %v792
      %v1013 = vunpack.c.h.b16 %v792
      %v1014 = vunpack.c.l.b16 %v793
      %v1015 = vunpack.c.h.b16 %v793
      %v1016 = vpack.c.b16 %v888, %v872
      %v1017 = vpack.c.b16 %v889, %v873
      %v1018 = vpack.c.b16 %v890, %v874
      %v1019 = vpack.c.b16 %v891, %v875
      %v1020 = vpack.c.b16 %v892, %v876
      %v1021 = vpack.c.b16 %v893, %v877
      %v1022 = vpack.c.b16 %v894, %v878
      %v1023 = vpack.c.b16 %v895, %v879
      %v1024 = vpack.c.b16 %v896, %v880
      %v1025 = vpack.c.b16 %v897, %v881
      %v1026 = vpack.c.b16 %v898, %v882
      %v1027 = vpack.c.b16 %v899, %v883
      %v1028 = vpack.c.b16 %v900, %v884
      %v1029 = vpack.c.b16 %v901, %v885
      %v1030 = vpack.c.b16 %v902, %v886
      %v1031 = vpack.c.b16 %v903, %v887
      %v1032 = vpack.c.b16 %v920, %v904
      %v1033 = vpack.c.b16 %v921, %v905
      %v1034 = vpack.c.b16 %v922, %v906
      %v1035 = vpack.c.b16 %v923, %v907
      %v1036 = vpack.c.b16 %v924, %v908
      %v1037 = vpack.c.b16 %v925, %v909
      %v1038 = vpack.c.b16 %v926, %v910
      %v1039 = vpack.c.b16 %v927, %v911
      %v1040 = vpack.c.b16 %v928, %v912
      %v1041 = vpack.c.b16 %v929, %v913
      %v1042 = vpack.c.b16 %v930, %v914
      %v1043 = vpack.c.b16 %v931, %v915
      %v1044 = vpack.c.b16 %v932, %v916
      %v1045 = vpack.c.b16 %v933, %v917
      %v1046 = vpack.c.b16 %v934, %v918
      %v1047 = vpack.c.b16 %v935, %v919
      %v1048 = vpack.c.b16 %v952, %v936
      %v1049 = vpack.c.b16 %v953, %v937
      %v1050 = vpack.c.b16 %v954, %v938
      %v1051 = vpack.c.b16 %v955, %v939
      %v1052 = vpack.c.b16 %v956, %v940
      %v1053 = vpack.c.b16 %v957, %v941
      %v1054 = vpack.c.b16 %v958, %v942
      %v1055 = vpack.c.b16 %v959, %v943
      %v1056 = vpack.c.b16 %v960, %v944
      %v1057 = vpack.c.b16 %v961, %v945
      %v1058 = vpack.c.b16 %v962, %v946
      %v1059 = vpack.c.b16 %v963, %v947
      %v1060 = vpack.c.b16 %v964, %v948
      %v1061 = vpack.c.b16 %v965, %v949
      %v1062 = vpack.c.b16 %v966, %v950
      %v1063 = vpack.c.b16 %v967, %v951
      %v1064 = vpack.c.b16 %v984, %v968
      %v1065 = vpack.c.b16 %v985, %v969
      %v1066 = vpack.c.b16 %v986, %v970
      %v1067 = vpack.c.b16 %v987, %v971
      %v1068 = vpack.c.b16 %v988, %v972
      %v1069 = vpack.c.b16 %v989, %v973
      %v1070 = vpack.c.b16 %v990, %v974
      %v1071 = vpack.c.b16 %v991, %v975
      %v1072 = vpack.c.b16 %v992, %v976
      %v1073 = vpack.c.b16 %v993, %v977
      %v1074 = vpack.c.b16 %v994, %v978
      %v1075 = vpack.c.b16 %v995, %v979
      %v1076 = vpack.c.b16 %v996, %v980
      %v1077 = vpack.c.b16 %v997, %v981
      %v1078 = vpack.c.b16 %v998, %v982
      %v1079 = vpack.c.b16 %v999, %v983
      %v1080 = vpack.c.b16 %v1000, %v1000
      %v1081 = vpack.c.b16 %v1001, %v1001
      %v1082 = vpack.c.b16 %v1002, %v1002
      %v1083 = vpack.c.b16 %v1003, %v1003
      %v1084 = vpack.c.b16 %v1004, %v1004
      %v1085 = vpack.c.b16 %v1005, %v1005
      %v1086 = vpack.c.b16 %v1006, %v1006
      %v1087 = vpack.c.b16 %v1007, %v1007
      %v1088 = vpack.c.b16 %v1008, %v1008
      %v1089 = vpack.c.b16 %v1009, %v1009
      %v1090 = vpack.c.b16 %v1010, %v1010
      %v1091 = vpack.c.b16 %v1011, %v1011
      %v1092 = vpack.c.b16 %v1012, %v1012
      %v1093 = vpack.c.b16 %v1013, %v1013
      %v1094 = vpack.c.b16 %v1014, %v1014
      %v1095 = vpack.c.b16 %v1015, %v1015
      %vm1160 = vcmask 588800
      %v1162 = vsel %vm1160, %v721, 0
      %vm1164 = vcmask 1043456
      %v1166 = vsel %vm1164, %v1080, 0
      %v1169 = vsel %vm1164, %v1081, 0
      %v1172 = vsel %vm1164, %v1082, 0
      %v1175 = vsel %vm1164, %v1083, 0
      %v1178 = vsel %vm1164, %v1084, 0
      %v1181 = vsel %vm1164, %v1085, 0
      %v1184 = vsel %vm1164, %v1086, 0
      %v1187 = vsel %vm1164, %v1087, 0
      %v1190 = vsel %vm1164, %v1088, 0
      %v1193 = vsel %vm1164, %v1089, 0
      %v1196 = vsel %vm1164, %v1090, 0
      %v1199 = vsel %vm1164, %v1091, 0
      %v1202 = vsel %vm1164, %v1092, 0
      %v1205 = vsel %vm1164, %v1093, 0
      %v1208 = vsel %vm1164, %v1094, 0
      %v1211 = vsel %vm1164, %v1095, 0
      %1213 = vmatprep.subr.bf16.mxu0 %v1017
      %1214 = vmatpush1.bf16.msra.mxu0 %v1016
      %1215 = vmatprep.subr.bf16.mxu0 %v1033
      %1216 = vmatpush1.bf16.msra.mxu0 %v1032
      %1217 = vmatprep.subr.bf16.mxu0 %v1049
      %1218 = vmatpush1.bf16.msra.mxu0 %v1048
      %1219 = vmatprep.subr.bf16.mxu0 %v1065
      %1220 = vmatpush1.bf16.msra.mxu0 %v1064
      %1221 = vmatprep.subr.bf16.mxu0 %v1169
      %1222 = vmatpush1.bf16.msra.mxu0 %v1166
      %1223 = vmatprep.subr.bf16.mxu0 0
      %1224 = vmatpush1.bf16.msra.mxu0 0
      %1225 = vmatprep.subr.bf16.mxu0 0
      %1226 = vmatpush1.bf16.msra.mxu0 0
      %1227 = vmatprep.subr.bf16.mxu0 0
      %1228 = vmatpush1.bf16.msra.mxu0 0
      %1229 = vmatprep.subr.bf16.mxu0 0
      %1230 = vmatpush1.bf16.msra.mxu0 0
      %1231 = vmatprep.subr.bf16.mxu0 0
      %1232 = vmatpush1.bf16.msra.mxu0 0
      %1233 = vmatprep.subr.bf16.mxu0 0
      %1234 = vmatpush1.bf16.msra.mxu0 0
      %1235 = vmatprep.subr.bf16.mxu0 0
      %1236 = vmatpush1.bf16.msra.mxu0 0
      %1237 = vmatprep.subr.bf16.mxu0 0
      %1238 = vmatpush1.bf16.msra.mxu0 0
      %1239 = vmatprep.subr.bf16.mxu0 0
      %1240 = vmatpush1.bf16.msra.mxu0 0
      %1241 = vmatprep.subr.bf16.mxu0 0
      %1242 = vmatpush1.bf16.msra.mxu0 0
      %1243 = vmatprep.subr.bf16.mxu0 0
      %1244 = vmatpush1.bf16.msra.mxu0 0
      %1245 = vmatprep.mubr.bf16.mxu0 0
      %1246 = vmatmul.mubr.bf16.gmra.mrb[0].mxu0 %v1162
      %v1247 = vpop.f32.mrb[0].mxu0
      %v1248 = vadd.f32 %v798, %v1247
      %v1249 = vpop.f32.mrb[0].mxu0
      %v1250 = vadd.f32 %v798, %v1249
      %v1251 = vpop.f32.mrb[0].mxu0
      %v1252 = vpop.f32.mrb[0].mxu0
      %1253 = vdwg.mxu0
      %1254 = vmatprep.subr.bf16.mxu0 %v1019
      %1255 = vmatpush1.bf16.msra.mxu0 %v1018
      %1256 = vmatprep.subr.bf16.mxu0 %v1035
      %1257 = vmatpush1.bf16.msra.mxu0 %v1034
      %1258 = vmatprep.subr.bf16.mxu0 %v1051
      %1259 = vmatpush1.bf16.msra.mxu0 %v1050
      %1260 = vmatprep.subr.bf16.mxu0 %v1067
      %1261 = vmatpush1.bf16.msra.mxu0 %v1066
      %1262 = vmatprep.subr.bf16.mxu0 %v1175
      %1263 = vmatpush1.bf16.msra.mxu0 %v1172
      %1264 = vmatprep.subr.bf16.mxu0 0
      %1265 = vmatpush1.bf16.msra.mxu0 0
      %1266 = vmatprep.subr.bf16.mxu0 0
      %1267 = vmatpush1.bf16.msra.mxu0 0
      %1268 = vmatprep.subr.bf16.mxu0 0
      %1269 = vmatpush1.bf16.msra.mxu0 0
      %1270 = vmatprep.subr.bf16.mxu0 0
      %1271 = vmatpush1.bf16.msra.mxu0 0
      %1272 = vmatprep.subr.bf16.mxu0 0
      %1273 = vmatpush1.bf16.msra.mxu0 0
      %1274 = vmatprep.subr.bf16.mxu0 0
      %1275 = vmatpush1.bf16.msra.mxu0 0
      %1276 = vmatprep.subr.bf16.mxu0 0
      %1277 = vmatpush1.bf16.msra.mxu0 0
      %1278 = vmatprep.subr.bf16.mxu0 0
      %1279 = vmatpush1.bf16.msra.mxu0 0
      %1280 = vmatprep.subr.bf16.mxu0 0
      %1281 = vmatpush1.bf16.msra.mxu0 0
      %1282 = vmatprep.subr.bf16.mxu0 0
      %1283 = vmatpush1.bf16.msra.mxu0 0
      %1284 = vmatprep.subr.bf16.mxu0 0
      %1285 = vmatpush1.bf16.msra.mxu0 0
      %1286 = vmatprep.mubr.bf16.mxu0 0
      %1287 = vmatmul.mubr.bf16.gmra.mrb[0].mxu0 %v1162
      %v1288 = vpop.f32.mrb[0].mxu0
      %v1289 = vadd.f32 %v798, %v1288
      %v1290 = vpop.f32.mrb[0].mxu0
      %v1291 = vadd.f32 %v798, %v1290
      %v1292 = vpop.f32.mrb[0].mxu0
      %v1293 = vpop.f32.mrb[0].mxu0
      %1294 = vdwg.mxu0
      %1295 = vmatprep.subr.bf16.mxu0 %v1021
      %1296 = vmatpush1.bf16.msra.mxu0 %v1020
      %1297 = vmatprep.subr.bf16.mxu0 %v1037
      %1298 = vmatpush1.bf16.msra.mxu0 %v1036
      %1299 = vmatprep.subr.bf16.mxu0 %v1053
      %1300 = vmatpush1.bf16.msra.mxu0 %v1052
      %1301 = vmatprep.subr.bf16.mxu0 %v1069
      %1302 = vmatpush1.bf16.msra.mxu0 %v1068
      %1303 = vmatprep.subr.bf16.mxu0 %v1181
      %1304 = vmatpush1.bf16.msra.mxu0 %v1178
      %1305 = vmatprep.subr.bf16.mxu0 0
      %1306 = vmatpush1.bf16.msra.mxu0 0
      %1307 = vmatprep.subr.bf16.mxu0 0
      %1308 = vmatpush1.bf16.msra.mxu0 0
      %1309 = vmatprep.subr.bf16.mxu0 0
      %1310 = vmatpush1.bf16.msra.mxu0 0
      %1311 = vmatprep.subr.bf16.mxu0 0
      %1312 = vmatpush1.bf16.msra.mxu0 0
      %1313 = vmatprep.subr.bf16.mxu0 0
      %1314 = vmatpush1.bf16.msra.mxu0 0
      %1315 = vmatprep.subr.bf16.mxu0 0
      %1316 = vmatpush1.bf16.msra.mxu0 0
      %1317 = vmatprep.subr.bf16.mxu0 0
      %1318 = vmatpush1.bf16.msra.mxu0 0
      %1319 = vmatprep.subr.bf16.mxu0 0
      %1320 = vmatpush1.bf16.msra.mxu0 0
      %1321 = vmatprep.subr.bf16.mxu0 0
      %1322 = vmatpush1.bf16.msra.mxu0 0
      %1323 = vmatprep.subr.bf16.mxu0 0
      %1324 = vmatpush1.bf16.msra.mxu0 0
      %1325 = vmatprep.subr.bf16.mxu0 0
      %1326 = vmatpush1.bf16.msra.mxu0 0
      %1327 = vmatprep.mubr.bf16.mxu0 0
      %1328 = vmatmul.mubr.bf16.gmra.mrb[0].mxu0 %v1162
      %v1329 = vpop.f32.mrb[0].mxu0
      %v1330 = vadd.f32 %v798, %v1329
      %v1331 = vpop.f32.mrb[0].mxu0
      %v1332 = vadd.f32 %v798, %v1331
      %v1333 = vpop.f32.mrb[0].mxu0
      %v1334 = vpop.f32.mrb[0].mxu0
      %1335 = vdwg.mxu0
      %1336 = vmatprep.subr.bf16.mxu0 %v1023
      %1337 = vmatpush1.bf16.msra.mxu0 %v1022
      %1338 = vmatprep.subr.bf16.mxu0 %v1039
      %1339 = vmatpush1.bf16.msra.mxu0 %v1038
      %1340 = vmatprep.subr.bf16.mxu0 %v1055
      %1341 = vmatpush1.bf16.msra.mxu0 %v1054
      %1342 = vmatprep.subr.bf16.mxu0 %v1071
      %1343 = vmatpush1.bf16.msra.mxu0 %v1070
      %1344 = vmatprep.subr.bf16.mxu0 %v1187
      %1345 = vmatpush1.bf16.msra.mxu0 %v1184
      %1346 = vmatprep.subr.bf16.mxu0 0
      %1347 = vmatpush1.bf16.msra.mxu0 0
      %1348 = vmatprep.subr.bf16.mxu0 0
      %1349 = vmatpush1.bf16.msra.mxu0 0
      %1350 = vmatprep.subr.bf16.mxu0 0
      %1351 = vmatpush1.bf16.msra.mxu0 0
      %1352 = vmatprep.subr.bf16.mxu0 0
      %1353 = vmatpush1.bf16.msra.mxu0 0
      %1354 = vmatprep.subr.bf16.mxu0 0
      %1355 = vmatpush1.bf16.msra.mxu0 0
      %1356 = vmatprep.subr.bf16.mxu0 0
      %1357 = vmatpush1.bf16.msra.mxu0 0
      %1358 = vmatprep.subr.bf16.mxu0 0
      %1359 = vmatpush1.bf16.msra.mxu0 0
      %1360 = vmatprep.subr.bf16.mxu0 0
      %1361 = vmatpush1.bf16.msra.mxu0 0
      %1362 = vmatprep.subr.bf16.mxu0 0
      %1363 = vmatpush1.bf16.msra.mxu0 0
      %1364 = vmatprep.subr.bf16.mxu0 0
      %1365 = vmatpush1.bf16.msra.mxu0 0
      %1366 = vmatprep.subr.bf16.mxu0 0
      %1367 = vmatpush1.bf16.msra.mxu0 0
      %1368 = vmatprep.mubr.bf16.mxu0 0
      %1369 = vmatmul.mubr.bf16.gmra.mrb[0].mxu0 %v1162
      %v1370 = vpop.f32.mrb[0].mxu0
      %v1371 = vadd.f32 %v798, %v1370
      %v1372 = vpop.f32.mrb[0].mxu0
      %v1373 = vadd.f32 %v798, %v1372
      %v1374 = vpop.f32.mrb[0].mxu0
      %v1375 = vpop.f32.mrb[0].mxu0
      %1376 = vdwg.mxu0
      %1377 = vmatprep.subr.bf16.mxu0 %v1025
      %1378 = vmatpush1.bf16.msra.mxu0 %v1024
      %1379 = vmatprep.subr.bf16.mxu0 %v1041
      %1380 = vmatpush1.bf16.msra.mxu0 %v1040
      %1381 = vmatprep.subr.bf16.mxu0 %v1057
      %1382 = vmatpush1.bf16.msra.mxu0 %v1056
      %1383 = vmatprep.subr.bf16.mxu0 %v1073
      %1384 = vmatpush1.bf16.msra.mxu0 %v1072
      %1385 = vmatprep.subr.bf16.mxu0 %v1193
      %1386 = vmatpush1.bf16.msra.mxu0 %v1190
      %1387 = vmatprep.subr.bf16.mxu0 0
      %1388 = vmatpush1.bf16.msra.mxu0 0
      %1389 = vmatprep.subr.bf16.mxu0 0
      %1390 = vmatpush1.bf16.msra.mxu0 0
      %1391 = vmatprep.subr.bf16.mxu0 0
      %1392 = vmatpush1.bf16.msra.mxu0 0
      %1393 = vmatprep.subr.bf16.mxu0 0
      %1394 = vmatpush1.bf16.msra.mxu0 0
      %1395 = vmatprep.subr.bf16.mxu0 0
      %1396 = vmatpush1.bf16.msra.mxu0 0
      %1397 = vmatprep.subr.bf16.mxu0 0
      %1398 = vmatpush1.bf16.msra.mxu0 0
      %1399 = vmatprep.subr.bf16.mxu0 0
      %1400 = vmatpush1.bf16.msra.mxu0 0
      %1401 = vmatprep.subr.bf16.mxu0 0
      %1402 = vmatpush1.bf16.msra.mxu0 0
      %1403 = vmatprep.subr.bf16.mxu0 0
      %1404 = vmatpush1.bf16.msra.mxu0 0
      %1405 = vmatprep.subr.bf16.mxu0 0
      %1406 = vmatpush1.bf16.msra.mxu0 0
      %1407 = vmatprep.subr.bf16.mxu0 0
      %1408 = vmatpush1.bf16.msra.mxu0 0
      %1409 = vmatprep.mubr.bf16.mxu0 0
      %1410 = vmatmul.mubr.bf16.gmra.mrb[0].mxu0 %v1162
      %v1411 = vpop.f32.mrb[0].mxu0
      %v1412 = vadd.f32 %v798, %v1411
      %v1413 = vpop.f32.mrb[0].mxu0
      %v1414 = vadd.f32 %v798, %v1413
      %v1415 = vpop.f32.mrb[0].mxu0
      %v1416 = vpop.f32.mrb[0].mxu0
      %1417 = vdwg.mxu0
      %1418 = vmatprep.subr.bf16.mxu0 %v1027
      %1419 = vmatpush1.bf16.msra.mxu0 %v1026
      %1420 = vmatprep.subr.bf16.mxu0 %v1043
      %1421 = vmatpush1.bf16.msra.mxu0 %v1042
      %1422 = vmatprep.subr.bf16.mxu0 %v1059
      %1423 = vmatpush1.bf16.msra.mxu0 %v1058
      %1424 = vmatprep.subr.bf16.mxu0 %v1075
      %1425 = vmatpush1.bf16.msra.mxu0 %v1074
      %1426 = vmatprep.subr.bf16.mxu0 %v1199
      %1427 = vmatpush1.bf16.msra.mxu0 %v1196
      %1428 = vmatprep.subr.bf16.mxu0 0
      %1429 = vmatpush1.bf16.msra.mxu0 0
      %1430 = vmatprep.subr.bf16.mxu0 0
      %1431 = vmatpush1.bf16.msra.mxu0 0
      %1432 = vmatprep.subr.bf16.mxu0 0
      %1433 = vmatpush1.bf16.msra.mxu0 0
      %1434 = vmatprep.subr.bf16.mxu0 0
      %1435 = vmatpush1.bf16.msra.mxu0 0
      %1436 = vmatprep.subr.bf16.mxu0 0
      %1437 = vmatpush1.bf16.msra.mxu0 0
      %1438 = vmatprep.subr.bf16.mxu0 0
      %1439 = vmatpush1.bf16.msra.mxu0 0
      %1440 = vmatprep.subr.bf16.mxu0 0
      %1441 = vmatpush1.bf16.msra.mxu0 0
      %1442 = vmatprep.subr.bf16.mxu0 0
      %1443 = vmatpush1.bf16.msra.mxu0 0
      %1444 = vmatprep.subr.bf16.mxu0 0
      %1445 = vmatpush1.bf16.msra.mxu0 0
      %1446 = vmatprep.subr.bf16.mxu0 0
      %1447 = vmatpush1.bf16.msra.mxu0 0
      %1448 = vmatprep.subr.bf16.mxu0 0
      %1449 = vmatpush1.bf16.msra.mxu0 0
      %1450 = vmatprep.mubr.bf16.mxu0 0
      %1451 = vmatmul.mubr.bf16.gmra.mrb[0].mxu0 %v1162
      %v1452 = vpop.f32.mrb[0].mxu0
      %v1453 = vadd.f32 %v798, %v1452
      %v1454 = vpop.f32.mrb[0].mxu0
      %v1455 = vadd.f32 %v798, %v1454
      %v1456 = vpop.f32.mrb[0].mxu0
      %v1457 = vpop.f32.mrb[0].mxu0
      %1458 = vdwg.mxu0
      %1459 = vmatprep.subr.bf16.mxu0 %v1029
      %1460 = vmatpush1.bf16.msra.mxu0 %v1028
      %1461 = vmatprep.subr.bf16.mxu0 %v1045
      %1462 = vmatpush1.bf16.msra.mxu0 %v1044
      %1463 = vmatprep.subr.bf16.mxu0 %v1061
      %1464 = vmatpush1.bf16.msra.mxu0 %v1060
      %1465 = vmatprep.subr.bf16.mxu0 %v1077
      %1466 = vmatpush1.bf16.msra.mxu0 %v1076
      %1467 = vmatprep.subr.bf16.mxu0 %v1205
      %1468 = vmatpush1.bf16.msra.mxu0 %v1202
      %1469 = vmatprep.subr.bf16.mxu0 0
      %1470 = vmatpush1.bf16.msra.mxu0 0
      %1471 = vmatprep.subr.bf16.mxu0 0
      %1472 = vmatpush1.bf16.msra.mxu0 0
      %1473 = vmatprep.subr.bf16.mxu0 0
      %1474 = vmatpush1.bf16.msra.mxu0 0
      %1475 = vmatprep.subr.bf16.mxu0 0
      %1476 = vmatpush1.bf16.msra.mxu0 0
      %1477 = vmatprep.subr.bf16.mxu0 0
      %1478 = vmatpush1.bf16.msra.mxu0 0
      %1479 = vmatprep.subr.bf16.mxu0 0
      %1480 = vmatpush1.bf16.msra.mxu0 0
      %1481 = vmatprep.subr.bf16.mxu0 0
      %1482 = vmatpush1.bf16.msra.mxu0 0
      %1483 = vmatprep.subr.bf16.mxu0 0
      %1484 = vmatpush1.bf16.msra.mxu0 0
      %1485 = vmatprep.subr.bf16.mxu0 0
      %1486 = vmatpush1.bf16.msra.mxu0 0
      %1487 = vmatprep.subr.bf16.mxu0 0
      %1488 = vmatpush1.bf16.msra.mxu0 0
      %1489 = vmatprep.subr.bf16.mxu0 0
      %1490 = vmatpush1.bf16.msra.mxu0 0
      %1491 = vmatprep.mubr.bf16.mxu0 0
      %1492 = vmatmul.mubr.bf16.gmra.mrb[0].mxu0 %v1162
      %v1493 = vpop.f32.mrb[0].mxu0
      %v1494 = vadd.f32 %v798, %v1493
      %v1495 = vpop.f32.mrb[0].mxu0
      %v1496 = vadd.f32 %v798, %v1495
      %v1497 = vpop.f32.mrb[0].mxu0
      %v1498 = vpop.f32.mrb[0].mxu0
      %1499 = vdwg.mxu0
      %1500 = vmatprep.subr.bf16.mxu0 %v1031
      %1501 = vmatpush1.bf16.msra.mxu0 %v1030
      %1502 = vmatprep.subr.bf16.mxu0 %v1047
      %1503 = vmatpush1.bf16.msra.mxu0 %v1046
      %1504 = vmatprep.subr.bf16.mxu0 %v1063
      %1505 = vmatpush1.bf16.msra.mxu0 %v1062
      %1506 = vmatprep.subr.bf16.mxu0 %v1079
      %1507 = vmatpush1.bf16.msra.mxu0 %v1078
      %1508 = vmatprep.subr.bf16.mxu0 %v1211
      %1509 = vmatpush1.bf16.msra.mxu0 %v1208
      %1510 = vmatprep.subr.bf16.mxu0 0
      %1511 = vmatpush1.bf16.msra.mxu0 0
      %1512 = vmatprep.subr.bf16.mxu0 0
      %1513 = vmatpush1.bf16.msra.mxu0 0
      %1514 = vmatprep.subr.bf16.mxu0 0
      %1515 = vmatpush1.bf16.msra.mxu0 0
      %1516 = vmatprep.subr.bf16.mxu0 0
      %1517 = vmatpush1.bf16.msra.mxu0 0
      %1518 = vmatprep.subr.bf16.mxu0 0
      %1519 = vmatpush1.bf16.msra.mxu0 0
      %1520 = vmatprep.subr.bf16.mxu0 0
      %1521 = vmatpush1.bf16.msra.mxu0 0
      %1522 = vmatprep.subr.bf16.mxu0 0
      %1523 = vmatpush1.bf16.msra.mxu0 0
      %1524 = vmatprep.subr.bf16.mxu0 0
      %1525 = vmatpush1.bf16.msra.mxu0 0
      %1526 = vmatprep.subr.bf16.mxu0 0
      %1527 = vmatpush1.bf16.msra.mxu0 0
      %1528 = vmatprep.subr.bf16.mxu0 0
      %1529 = vmatpush1.bf16.msra.mxu0 0
      %1530 = vmatprep.subr.bf16.mxu0 0
      %1531 = vmatpush1.bf16.msra.mxu0 0
      %1532 = vmatprep.mubr.bf16.mxu0 0
      %1533 = vmatmul.mubr.bf16.gmra.mrb[0].mxu0 %v1162
      %v1534 = vpop.f32.mrb[0].mxu0
      %v1535 = vadd.f32 %v798, %v1534
      %v1536 = vpop.f32.mrb[0].mxu0
      %v1537 = vadd.f32 %v798, %v1536
      %v1538 = vpop.f32.mrb[0].mxu0
      %v1539 = vpop.f32.mrb[0].mxu0
      %1540 = vdwg.mxu0
      %1541 = vst [vmem:[%s206] sm:$0xff] %v1248
      %1542 = vst [vmem:[%s206 + $0x8] sm:$0xff] %v1250
      %1543 = vst [vmem:[%s206 + $0x10] sm:$0xff] %v1289
      %1544 = vst [vmem:[%s206 + $0x18] sm:$0xff] %v1291
      %1545 = vst [vmem:[%s206 + $0x20] sm:$0xff] %v1330
      %1546 = vst [vmem:[%s206 + $0x28] sm:$0xff] %v1332
      %1547 = vst [vmem:[%s206 + $0x30] sm:$0xff] %v1371
      %1548 = vst [vmem:[%s206 + $0x38] sm:$0xff] %v1373
      %1549 = vst [vmem:[%s206 + $0x40] sm:$0xff] %v1412
      %1550 = vst [vmem:[%s206 + $0x48] sm:$0xff] %v1414
      %1551 = vst [vmem:[%s206 + $0x50] sm:$0xff] %v1453
      %1552 = vst [vmem:[%s206 + $0x58] sm:$0xff] %v1455
      %1553 = vst [vmem:[%s206 + $0x60] sm:$0xff] %v1494
      %1554 = vst [vmem:[%s206 + $0x68] sm:$0xff] %v1496
      %1555 = vst [vmem:[%s206 + $0x70] sm:$0xff] %v1535
      %1556 = vst [vmem:[%s206 + $0x78] sm:$0xff] %v1537
      %p1557 = scmp.lt.s32.totalorder %s18, 1
      %s1558 = scalar_select %p1557, %s18, 1
      %p1559 = scmp.lt.s32.totalorder %s19, 0
      %s1560 = scalar_select %p1559, %s19, 0
      %s1561 = smul.addr %s1560, 16
      %s1562 = smul.addr %s1558, 16
      %s1563 = sadd.s32 %s1561, %s1562
      %s1564 = smul.addr %s1563, 8
      %s1565 = scalar_lea.vmem %s3, %s1564
      // Predicated region
      $region33: #{conv_layer_forward.1} parent=31 // pred_check
        %p1566 = pneg %p116
      $region34: #{conv_layer_forward.1} parent=31 // pred_check_branch
        %1568 = sbr.rel (%p1566) target = $region36
      $region35: #{conv_layer_forward.1} parent=31 // pred_region
        _
      $region36: #{conv_layer_forward.1} parent=31 // pred_fallthru
        _
    $region32: #{conv_layer_forward.1} parent=5 // pred_fallthru
      _
    %p1569 = scmp.le.s32.totalorder 2, %s9
    // Predicated region
    $region37: #{conv_layer_forward.1} parent=5 // pred_check
      %p1570 = pneg %p1569
    $region38: #{conv_layer_forward.1} parent=5 // pred_check_branch
      %1572 = sbr.rel (%p1570) target = $region40
    $region39: #{conv_layer_forward.1} parent=5 // pred_region
      %s1573 = ssub.s32 %s9, 2
      // Predicated region
      $region41: #{conv_layer_forward.1} parent=39 // pred_check
        %p1574 = pneg %p122
      $region42: #{conv_layer_forward.1} parent=39 // pred_check_branch
        %1576 = sbr.rel (%p1574) target = $region44
      $region43: #{conv_layer_forward.1} parent=39 // pred_region
        %p1577 = scmp.lt.s32.totalorder %s20, 1
        %s1578 = scalar_select %p1577, %s20, 1
        %p1579 = scmp.lt.s32.totalorder %s21, 0
        %s1580 = scalar_select %p1579, %s21, 0
        %s1581 = smul.addr %s1580, 16
        %s1582 = smul.addr %s1578, 16
        %s1583 = sadd.s32 %s1581, %s1582
        %s1584 = smul.addr %s1583, 8
        %s1585 = scalar_lea.vmem %s3, %s1584
      $region44: #{conv_layer_forward.1} parent=39 // pred_fallthru
        _
    $region40: #{conv_layer_forward.1} parent=5 // pred_fallthru
      _
  $region6: #{conv_layer_forward.1} parent=0 // loop_footer
    %s13 = sadd.s32 1, %s9
  $region7: #{conv_layer_forward.1} parent=0 // loop_footer_branch
    %8 = sbr.rel target = $region3
  $region8: #{conv_layer_forward.1} parent=0 // loop_exit
    _

</llo_original>
